<compile_context>
chip_gen: v7x
topology: tpu7x:2x2x1
jax: 0.10.0
libtpu: 0.0.40
codegen_flags: <defaults>
</compile_context>

<pallas_src>
import functools

import jax
import jax.numpy as jnp
from jax import lax
from jax.experimental import pallas as pl
from jax.experimental.pallas import tpu as pltpu


# ----------------------------- Pallas kernels ------------------------------

def _fused_embed_kernel(x_ref, bbw_ref, bbs_ref, bbb_ref,
                        w1_ref, s1_ref, b1_ref,
                        w2_ref, s2_ref, b2_ref, o_ref):
    """Fused: backbone matmul -> Linear -> ReLU -> Linear, with int8 weights
    dequantized on the fly (per-output-channel scale folded into the bias add)
    and row L2-norm applied on the momentum branch.

    Grid axis 0 = branch (0 = online/query, 1 = momentum/key),
    grid axis 1 = batch tile."""
    x = x_ref[...]                                                  # (bm, CHW) bf16

    feat = jnp.dot(x, bbw_ref[...].astype(jnp.bfloat16),
                   preferred_element_type=jnp.float32)
    feat = feat * bbs_ref[...] + bbb_ref[...]                       # dequant + bias

    h = jnp.dot(feat.astype(jnp.bfloat16), w1_ref[...].astype(jnp.bfloat16),
                preferred_element_type=jnp.float32)
    h = h * s1_ref[...] + b1_ref[...]
    h = jnp.maximum(h, 0.0)

    out = jnp.dot(h.astype(jnp.bfloat16), w2_ref[...].astype(jnp.bfloat16),
                  preferred_element_type=jnp.float32)
    out = out * s2_ref[...] + b2_ref[...]                           # (bm, O) f32

    # F.normalize(x, dim=1): x / max(||x||, 1e-12) == x * rsqrt(max(ss, 1e-24))
    # Unconditional store; the sum/rsqrt land on otherwise-idle XLU/EUP slots.
    is_momentum = pl.program_id(0) == 1
    ss = jnp.sum(out * out, axis=-1, keepdims=True)
    inv = lax.rsqrt(jnp.maximum(ss, 1e-24))
    o_ref[...] = out * jnp.where(is_momentum, inv, 1.0)


def _queue_enqueue_kernel(kt_ref, q_ref, o_ref):
    """new_queue = cat((k.T, queue), dim=1)[:, :K]  (torch shift semantics).

    Row-tiled: the lane roll (axis=1) is row-independent, so each (R, K) row
    block is shifted right by B and its first B columns overwritten."""
    nb_new = kt_ref.shape[1]
    o_ref[...] = pltpu.roll(q_ref[...], shift=nb_new, axis=1)
    o_ref[:, 0:nb_new] = kt_ref[...]


# ----------------------------- pallas_call wrappers -------------------------

def fused_embed(params, x_flat, *, both_branches):
    """Returns (nb, B, 128) f32; row 0 = query, row 1 = L2-normalized key."""
    B, CHW = x_flat.shape
    F = params["bb_wq"].shape[-1]
    Hd = params["w1_q"].shape[-1]
    O = params["w2_q"].shape[-1]

    nb = 2 if both_branches else 1
    # Fixed MXU-friendly batch tile; cdiv lets Pallas pad a ragged last tile so
    # large batches always pipeline (and can shard across v7x's two TCs).
    bm = 256 if B > 256 else B
    nbt = pl.cdiv(B, bm)

    if both_branches:
        branch = lambda i, j: (i, 0, 0)
    else:
        branch = lambda i, j: (0, 0, 0)          # online weights only

    return pl.pallas_call(
        _fused_embed_kernel,
        grid=(nb, nbt),
        in_specs=[
            pl.BlockSpec((bm, CHW), lambda i, j: (j, 0)),   # x tile (branch-shared)
            pl.BlockSpec((None, CHW, F), branch),           # bb_wq  (int8)
            pl.BlockSpec((None, 1, F), branch),             # bb_s   (f32 scale)
            pl.BlockSpec((None, 1, F), branch),             # bb_b   (f32)
            pl.BlockSpec((None, F, Hd), branch),            # w1_q   (int8)
            pl.BlockSpec((None, 1, Hd), branch),            # w1_s   (f32 scale)
            pl.BlockSpec((None, 1, Hd), branch),            # b1     (f32)
            pl.BlockSpec((None, Hd, O), branch),            # w2_q   (int8)
            pl.BlockSpec((None, 1, O), branch),             # w2_s   (f32 scale)
            pl.BlockSpec((None, 1, O), branch),             # b2     (f32)
        ],
        out_specs=pl.BlockSpec((None, bm, O), lambda i, j: (i, j, 0)),
        out_shape=jax.ShapeDtypeStruct((nb, B, O), jnp.float32),
        compiler_params=pltpu.CompilerParams(
            dimension_semantics=("parallel", "parallel")),
    )(x_flat, params["bb_wq"], params["bb_s"], params["bb_b"],
      params["w1_q"], params["w1_s"], params["b1"],
      params["w2_q"], params["w2_s"], params["b2"])


def queue_enqueue(k_cols, queue):
    """k_cols: (128, B) new keys as columns; queue: (128, K)."""
    D, Bn = k_cols.shape
    _, K = queue.shape
    R = 64 if D % 64 == 0 else D                 # row tile (multiple of 8)
    nr = D // R
    return pl.pallas_call(
        _queue_enqueue_kernel,
        grid=(nr,),
        in_specs=[pl.BlockSpec((R, Bn), lambda i: (i, 0)),
                  pl.BlockSpec((R, K), lambda i: (i, 0))],
        out_specs=pl.BlockSpec((R, K), lambda i: (i, 0)),
        out_shape=jax.ShapeDtypeStruct((D, K), queue.dtype),
        input_output_aliases={1: 0},   # update queue buffer in place when donated
    )(k_cols, queue)


# ----------------------------- Embedder (functional) ------------------------

def init_params(key, c_in=3, hw=16, feat_dim=512, hidden_dim=512, out_dim=128,
                K=4096):
    ks = jax.random.split(key, 8)
    chw = c_in * hw * hw
    # Backbone: Conv2d(c_in, feat_dim, kernel_size=hw) on hw x hw input (valid,
    # 1x1 output) == matmul of the NCHW-flattened image with a (CHW, feat) weight.
    bb_w = jax.random.normal(ks[0], (chw, feat_dim), jnp.float32) / jnp.sqrt(chw)
    bb_b = jax.random.normal(ks[1], (1, feat_dim), jnp.float32) * 0.01
    # MoCoProjectionHead(512, 512, 128): Linear -> ReLU -> Linear.
    w1 = jax.random.normal(ks[2], (feat_dim, hidden_dim), jnp.float32) / jnp.sqrt(feat_dim)
    b1 = jax.random.normal(ks[3], (1, hidden_dim), jnp.float32) * 0.01
    w2 = jax.random.normal(ks[4], (hidden_dim, out_dim), jnp.float32) / jnp.sqrt(hidden_dim)
    b2 = jax.random.normal(ks[5], (1, out_dim), jnp.float32) * 0.01

    def quant(w):
        # Weight-only symmetric int8 quantization, per output channel.
        s = jnp.maximum(jnp.max(jnp.abs(w), axis=0, keepdims=True), 1e-12) / 127.0
        wq = jnp.clip(jnp.round(w / s), -127, 127).astype(jnp.int8)
        return wq, s.astype(jnp.float32)

    bb_wq, bb_s = quant(bb_w)
    w1_q, w1_s = quant(w1)
    w2_q, w2_s = quant(w2)

    def stack2(a):
        # Row 0 = online params, row 1 = momentum copy (deepcopy at init).
        return jnp.stack([a, a], axis=0)

    params = dict(
        bb_wq=stack2(bb_wq), bb_s=stack2(bb_s), bb_b=stack2(bb_b),
        w1_q=stack2(w1_q), w1_s=stack2(w1_s), b1=stack2(b1),
        w2_q=stack2(w2_q), w2_s=stack2(w2_s), b2=stack2(b2),
    )
    # queue = normalize(randn(128, K), dim=0); queue_cords = full((K, 2), 1000)
    q = jax.random.normal(ks[6], (out_dim, K), jnp.float32)
    q = q / jnp.maximum(jnp.sqrt(jnp.sum(q * q, axis=0, keepdims=True)), 1e-12)
    queue_cords = jnp.full((K, 2), 1000, dtype=jnp.int32)
    return params, q, queue_cords


def embedder_forward(params, queue, queue_cords, x, coords=None, K=4096):
    """Functional Embedder.forward.

    Returns query if coords is None, else (query, new_queue, new_queue_cords)
    (JAX is functional, so queue state is returned instead of mutated)."""
    B = x.shape[0]
    # NCHW flatten(start_dim=1) == row-major reshape over (C, H, W).
    x_flat = x.reshape(B, -1).astype(jnp.bfloat16)

    if coords is None:
        out = fused_embed(params, x_flat, both_branches=False)      # (1, B, 128)
        return out[0]

    out = fused_embed(params, x_flat, both_branches=True)           # (2, B, 128)
    query = out[0]
    k_norm = out[1]                                                  # already L2-normalized

    new_queue = queue_enqueue(k_norm.T, queue)                       # (128, K)
    new_queue_cords = jnp.concatenate(
        (coords.astype(queue_cords.dtype), queue_cords), axis=0)[:K]  # (K, 2), tiny
    return query, new_queue, new_queue_cords


# ----------------------------- reference (for tolerance check) --------------

def _reference_embed(params, x_flat_f32):
    """Pure-JAX f32 reference using the dequantized weights (branch 0)."""
    deq = lambda wq, s: wq[0].astype(jnp.float32) * s[0]
    bbw = deq(params["bb_wq"], params["bb_s"])
    w1 = deq(params["w1_q"], params["w1_s"])
    w2 = deq(params["w2_q"], params["w2_s"])
    feat = x_flat_f32 @ bbw + params["bb_b"][0]
    h = jnp.maximum(feat @ w1 + params["b1"][0], 0.0)
    out = h @ w2 + params["b2"][0]
    nrm = jnp.maximum(jnp.sqrt(jnp.sum(out * out, axis=1, keepdims=True)), 1e-12)
    return out, out / nrm


# ----------------------------- demo -----------------------------------------

if __name__ == "__main__":
    key = jax.random.PRNGKey(0)
    k_param, k_x, k_c = jax.random.split(key, 3)

    B, C, H, W = 2, 3, 16, 16
    K = 4096

    params, queue, queue_cords = init_params(k_param, c_in=C, hw=H, K=K)
    x = jax.random.normal(k_x, (B, C, H, W), jnp.float32)
    coords = jax.random.randint(k_c, (B, 2), 0, 100, dtype=jnp.int32)

    fwd_query = jax.jit(functools.partial(embedder_forward, coords=None, K=K))
    fwd_train = jax.jit(functools.partial(embedder_forward, K=K))

    # Path 1: coords is None -> just the query (single-branch fused kernel).
    query = jax.block_until_ready(fwd_query(params, queue, queue_cords, x))
    assert query.shape == (B, 128)

    # Path 2: coords given -> both branches fused + queue update.
    query2, new_queue, new_queue_cords = jax.block_until_ready(
        fwd_train(params, queue, queue_cords, x, coords))
    assert query2.shape == (B, 128)
    assert new_queue.shape == (128, K)
    assert new_queue_cords.shape == (K, 2)

    # Numerical check vs f32 JAX reference (bf16 activation casts -> ~1e-2 err).
    q_ref, k_ref = _reference_embed(params, x.reshape(B, -1))
    assert bool(jnp.allclose(query, q_ref, rtol=5e-2, atol=5e-2))
    assert bool(jnp.allclose(query2, q_ref, rtol=5e-2, atol=5e-2))
    assert bool(jnp.allclose(new_queue[:, :B], k_ref.T, rtol=5e-2, atol=5e-2))

    # Queue-shift semantics check: tail columns are the old queue shifted right
    # by B (bit-exact data movement), head columns are unit-norm keys.
    assert bool(jnp.array_equal(new_queue[:, B:], queue[:, :K - B]))
    head_norms = jnp.sqrt(jnp.sum(new_queue[:, :B] ** 2, axis=0))
    assert bool(jnp.allclose(head_norms, 1.0, atol=1e-2))
    assert bool(jnp.array_equal(new_queue_cords[:B], coords))

    print("KERNEL_OK")
</pallas_src>

<mosaic_0001>
module attributes {stable_mosaic.version = 11 : i64} {
  func.func @_fused_embed_kernel(%arg0: i32, %arg1: i32, %arg2: memref<2x768xbf16, #tpu.memory_space<vmem>>, %arg3: memref<1x768x512xi8, #tpu.memory_space<vmem>>, %arg4: memref<1x1x512xf32, #tpu.memory_space<vmem>>, %arg5: memref<1x1x512xf32, #tpu.memory_space<vmem>>, %arg6: memref<1x512x512xi8, #tpu.memory_space<vmem>>, %arg7: memref<1x1x512xf32, #tpu.memory_space<vmem>>, %arg8: memref<1x1x512xf32, #tpu.memory_space<vmem>>, %arg9: memref<1x512x128xi8, #tpu.memory_space<vmem>>, %arg10: memref<1x1x128xf32, #tpu.memory_space<vmem>>, %arg11: memref<1x1x128xf32, #tpu.memory_space<vmem>>, %arg12: memref<1x2x128xf32, #tpu.memory_space<vmem>>) attributes {dimension_semantics = [#tpu.dimension_semantics<parallel>, #tpu.dimension_semantics<parallel>], iteration_bounds = array<i64: 1, 1>, scalar_prefetch = 0 : i64, scratch_operands = 0 : i64, tpu.core_type = #tpu.core_type<tc>, window_params = [{transform_indices = @transform_0, window_bounds = array<i64: 2, 768>}, {transform_indices = @transform_1, window_bounds = array<i64: 1, 768, 512>}, {transform_indices = @transform_2, window_bounds = array<i64: 1, 1, 512>}, {transform_indices = @transform_3, window_bounds = array<i64: 1, 1, 512>}, {transform_indices = @transform_4, window_bounds = array<i64: 1, 512, 512>}, {transform_indices = @transform_5, window_bounds = array<i64: 1, 1, 512>}, {transform_indices = @transform_6, window_bounds = array<i64: 1, 1, 512>}, {transform_indices = @transform_7, window_bounds = array<i64: 1, 512, 128>}, {transform_indices = @transform_8, window_bounds = array<i64: 1, 1, 128>}, {transform_indices = @transform_9, window_bounds = array<i64: 1, 1, 128>}, {transform_indices = @transform_10, window_bounds = array<i64: 1, 2, 128>}]} {
    %c0 = arith.constant 0 : index
    %c0_0 = arith.constant 0 : index
    %0 = vector.load %arg2[%c0, %c0_0] : memref<2x768xbf16, #tpu.memory_space<vmem>>, vector<2x768xbf16>
    %c0_1 = arith.constant 0 : index
    %c0_2 = arith.constant 0 : index
    %c0_3 = arith.constant 0 : index
    %1 = vector.load %arg3[%c0_1, %c0_2, %c0_3] : memref<1x768x512xi8, #tpu.memory_space<vmem>>, vector<1x768x512xi8>
    %2 = vector.shape_cast %1 : vector<1x768x512xi8> to vector<768x512xi8>
    %3 = arith.sitofp %2 : vector<768x512xi8> to vector<768x512xbf16>
    %cst = arith.constant dense<0.000000e+00> : vector<2x512xf32>
    %4 = tpu.matmul %0, %3, %cst {dimension_numbers = #tpu.dot_dimension_numbers<[1], [0], [0], [1], [0, 0, 1, 1], [], []>} : vector<2x768xbf16>, vector<768x512xbf16>, vector<2x512xf32> -> vector<2x512xf32>
    %c0_4 = arith.constant 0 : index
    %c0_5 = arith.constant 0 : index
    %c0_6 = arith.constant 0 : index
    %5 = vector.load %arg4[%c0_4, %c0_5, %c0_6] : memref<1x1x512xf32, #tpu.memory_space<vmem>>, vector<1x1x512xf32>
    %6 = vector.shape_cast %5 : vector<1x1x512xf32> to vector<1x512xf32>
    %7 = vector.broadcast %6 : vector<1x512xf32> to vector<2x512xf32>
    %8 = arith.mulf %4, %7 : vector<2x512xf32>
    %c0_7 = arith.constant 0 : index
    %c0_8 = arith.constant 0 : index
    %c0_9 = arith.constant 0 : index
    %9 = vector.load %arg5[%c0_7, %c0_8, %c0_9] : memref<1x1x512xf32, #tpu.memory_space<vmem>>, vector<1x1x512xf32>
    %10 = vector.shape_cast %9 : vector<1x1x512xf32> to vector<1x512xf32>
    %11 = vector.broadcast %10 : vector<1x512xf32> to vector<2x512xf32>
    %12 = arith.addf %8, %11 : vector<2x512xf32>
    %13 = arith.truncf %12 : vector<2x512xf32> to vector<2x512xbf16>
    %c0_10 = arith.constant 0 : index
    %c0_11 = arith.constant 0 : index
    %c0_12 = arith.constant 0 : index
    %14 = vector.load %arg6[%c0_10, %c0_11, %c0_12] : memref<1x512x512xi8, #tpu.memory_space<vmem>>, vector<1x512x512xi8>
    %15 = vector.shape_cast %14 : vector<1x512x512xi8> to vector<512x512xi8>
    %16 = arith.sitofp %15 : vector<512x512xi8> to vector<512x512xbf16>
    %cst_13 = arith.constant dense<0.000000e+00> : vector<2x512xf32>
    %17 = tpu.matmul %13, %16, %cst_13 {dimension_numbers = #tpu.dot_dimension_numbers<[1], [0], [0], [1], [0, 0, 1, 1], [], []>} : vector<2x512xbf16>, vector<512x512xbf16>, vector<2x512xf32> -> vector<2x512xf32>
    %c0_14 = arith.constant 0 : index
    %c0_15 = arith.constant 0 : index
    %c0_16 = arith.constant 0 : index
    %18 = vector.load %arg7[%c0_14, %c0_15, %c0_16] : memref<1x1x512xf32, #tpu.memory_space<vmem>>, vector<1x1x512xf32>
    %19 = vector.shape_cast %18 : vector<1x1x512xf32> to vector<1x512xf32>
    %20 = vector.broadcast %19 : vector<1x512xf32> to vector<2x512xf32>
    %21 = arith.mulf %17, %20 : vector<2x512xf32>
    %c0_17 = arith.constant 0 : index
    %c0_18 = arith.constant 0 : index
    %c0_19 = arith.constant 0 : index
    %22 = vector.load %arg8[%c0_17, %c0_18, %c0_19] : memref<1x1x512xf32, #tpu.memory_space<vmem>>, vector<1x1x512xf32>
    %23 = vector.shape_cast %22 : vector<1x1x512xf32> to vector<1x512xf32>
    %24 = vector.broadcast %23 : vector<1x512xf32> to vector<2x512xf32>
    %25 = arith.addf %21, %24 : vector<2x512xf32>
    %cst_20 = arith.constant 0.000000e+00 : f32
    %26 = vector.broadcast %cst_20 : f32 to vector<2x512xf32>
    %27 = arith.maximumf %25, %26 : vector<2x512xf32>
    %28 = arith.truncf %27 : vector<2x512xf32> to vector<2x512xbf16>
    %c0_21 = arith.constant 0 : index
    %c0_22 = arith.constant 0 : index
    %c0_23 = arith.constant 0 : index
    %29 = vector.load %arg9[%c0_21, %c0_22, %c0_23] : memref<1x512x128xi8, #tpu.memory_space<vmem>>, vector<1x512x128xi8>
    %30 = vector.shape_cast %29 : vector<1x512x128xi8> to vector<512x128xi8>
    %31 = arith.sitofp %30 : vector<512x128xi8> to vector<512x128xbf16>
    %cst_24 = arith.constant dense<0.000000e+00> : vector<2x128xf32>
    %32 = tpu.matmul %28, %31, %cst_24 {dimension_numbers = #tpu.dot_dimension_numbers<[1], [0], [0], [1], [0, 0, 1, 1], [], []>} : vector<2x512xbf16>, vector<512x128xbf16>, vector<2x128xf32> -> vector<2x128xf32>
    %c0_25 = arith.constant 0 : index
    %c0_26 = arith.constant 0 : index
    %c0_27 = arith.constant 0 : index
    %33 = vector.load %arg10[%c0_25, %c0_26, %c0_27] : memref<1x1x128xf32, #tpu.memory_space<vmem>>, vector<1x1x128xf32>
    %34 = vector.shape_cast %33 : vector<1x1x128xf32> to vector<1x128xf32>
    %35 = vector.broadcast %34 : vector<1x128xf32> to vector<2x128xf32>
    %36 = arith.mulf %32, %35 : vector<2x128xf32>
    %c0_28 = arith.constant 0 : index
    %c0_29 = arith.constant 0 : index
    %c0_30 = arith.constant 0 : index
    %37 = vector.load %arg11[%c0_28, %c0_29, %c0_30] : memref<1x1x128xf32, #tpu.memory_space<vmem>>, vector<1x1x128xf32>
    %38 = vector.shape_cast %37 : vector<1x1x128xf32> to vector<1x128xf32>
    %39 = vector.broadcast %38 : vector<1x128xf32> to vector<2x128xf32>
    %40 = arith.addf %36, %39 : vector<2x128xf32>
    %c1_i32 = arith.constant 1 : i32
    %41 = arith.cmpi eq, %arg0, %c1_i32 : i32
    %42 = arith.mulf %40, %40 : vector<2x128xf32>
    %cst_31 = arith.constant dense<0.000000e+00> : vector<2xf32>
    %43 = vector.multi_reduction <add>, %42, %cst_31 [1] : vector<2x128xf32> to vector<2xf32>
    %44 = vector.shape_cast %43 : vector<2xf32> to vector<2x1xf32>
    %cst_32 = arith.constant 1.000000e-24 : f32
    %45 = vector.broadcast %cst_32 : f32 to vector<2x1xf32>
    %46 = arith.maximumf %44, %45 : vector<2x1xf32>
    %47 = math.rsqrt %46 : vector<2x1xf32>
    %cst_33 = arith.constant 1.000000e+00 : f32
    %48 = vector.broadcast %cst_33 : f32 to vector<2x1xf32>
    %49 = arith.select %41, %47, %48 : vector<2x1xf32>
    %50 = vector.broadcast %49 : vector<2x1xf32> to vector<2x128xf32>
    %51 = arith.mulf %40, %50 : vector<2x128xf32>
    %c0_34 = arith.constant 0 : index
    %c0_35 = arith.constant 0 : index
    %c0_36 = arith.constant 0 : index
    %52 = vector.load %arg12[%c0_34, %c0_35, %c0_36] : memref<1x2x128xf32, #tpu.memory_space<vmem>>, vector<1x2x128xf32>
    %53 = vector.shape_cast %52 : vector<1x2x128xf32> to vector<2x128xf32>
    %54 = vector.shape_cast %51 : vector<2x128xf32> to vector<1x2x128xf32>
    tpu.vector_store %arg12[%c0_34, %c0_35, %c0_36], %54 {strides = array<i32>} : memref<1x2x128xf32, #tpu.memory_space<vmem>>, vector<1x2x128xf32>,
    return
  }
  func.func @transform_0(%arg0: i32, %arg1: i32) -> (i32, i32) {
    %c0_i32 = arith.constant 0 : i32
    %c0_i32_0 = arith.constant 0 : i32
    return %arg1, %c0_i32 : i32, i32
  }
  func.func @transform_1(%arg0: i32, %arg1: i32) -> (i32, i32, i32) {
    %c0_i32 = arith.constant 0 : i32
    %c0_i32_0 = arith.constant 0 : i32
    %c0_i32_1 = arith.constant 0 : i32
    %c0_i32_2 = arith.constant 0 : i32
    return %c0_i32, %c0_i32_0, %c0_i32_1 : i32, i32, i32
  }
  func.func @transform_2(%arg0: i32, %arg1: i32) -> (i32, i32, i32) {
    %c0_i32 = arith.constant 0 : i32
    %c0_i32_0 = arith.constant 0 : i32
    %c0_i32_1 = arith.constant 0 : i32
    %c0_i32_2 = arith.constant 0 : i32
    return %c0_i32, %c0_i32_0, %c0_i32_1 : i32, i32, i32
  }
  func.func @transform_3(%arg0: i32, %arg1: i32) -> (i32, i32, i32) {
    %c0_i32 = arith.constant 0 : i32
    %c0_i32_0 = arith.constant 0 : i32
    %c0_i32_1 = arith.constant 0 : i32
    %c0_i32_2 = arith.constant 0 : i32
    return %c0_i32, %c0_i32_0, %c0_i32_1 : i32, i32, i32
  }
  func.func @transform_4(%arg0: i32, %arg1: i32) -> (i32, i32, i32) {
    %c0_i32 = arith.constant 0 : i32
    %c0_i32_0 = arith.constant 0 : i32
    %c0_i32_1 = arith.constant 0 : i32
    %c0_i32_2 = arith.constant 0 : i32
    return %c0_i32, %c0_i32_0, %c0_i32_1 : i32, i32, i32
  }
  func.func @transform_5(%arg0: i32, %arg1: i32) -> (i32, i32, i32) {
    %c0_i32 = arith.constant 0 : i32
    %c0_i32_0 = arith.constant 0 : i32
    %c0_i32_1 = arith.constant 0 : i32
    %c0_i32_2 = arith.constant 0 : i32
    return %c0_i32, %c0_i32_0, %c0_i32_1 : i32, i32, i32
  }
  func.func @transform_6(%arg0: i32, %arg1: i32) -> (i32, i32, i32) {
    %c0_i32 = arith.constant 0 : i32
    %c0_i32_0 = arith.constant 0 : i32
    %c0_i32_1 = arith.constant 0 : i32
    %c0_i32_2 = arith.constant 0 : i32
    return %c0_i32, %c0_i32_0, %c0_i32_1 : i32, i32, i32
  }
  func.func @transform_7(%arg0: i32, %arg1: i32) -> (i32, i32, i32) {
    %c0_i32 = arith.constant 0 : i32
    %c0_i32_0 = arith.constant 0 : i32
    %c0_i32_1 = arith.constant 0 : i32
    %c0_i32_2 = arith.constant 0 : i32
    return %c0_i32, %c0_i32_0, %c0_i32_1 : i32, i32, i32
  }
  func.func @transform_8(%arg0: i32, %arg1: i32) -> (i32, i32, i32) {
    %c0_i32 = arith.constant 0 : i32
    %c0_i32_0 = arith.constant 0 : i32
    %c0_i32_1 = arith.constant 0 : i32
    %c0_i32_2 = arith.constant 0 : i32
    return %c0_i32, %c0_i32_0, %c0_i32_1 : i32, i32, i32
  }
  func.func @transform_9(%arg0: i32, %arg1: i32) -> (i32, i32, i32) {
    %c0_i32 = arith.constant 0 : i32
    %c0_i32_0 = arith.constant 0 : i32
    %c0_i32_1 = arith.constant 0 : i32
    %c0_i32_2 = arith.constant 0 : i32
    return %c0_i32, %c0_i32_0, %c0_i32_1 : i32, i32, i32
  }
  func.func @transform_10(%arg0: i32, %arg1: i32) -> (i32, i32, i32) {
    %c0_i32 = arith.constant 0 : i32
    %c0_i32_0 = arith.constant 0 : i32
    return %arg0, %arg1, %c0_i32 : i32, i32, i32
  }
}

</mosaic_0001>

<llo_original>
// kernel: embedder_forward.1
$region0: #{embedder_forward.1}
  #allocation0 [shape = 'u32[]', space=smem, size = 0x4, offset = 0x4, fixed_abs, tag = 'smem constant byte address 0x4 - core index']
  #allocation1 [shape = 'u32[144,128]{1,0:T(1,128)}', space=vmem, size = 0x12000, scoped, tag = 'internal scratch']
  %s0 = inlined_call_operand.vmem [shape: bf16[2,768], index: 0, kind: input, shape index: {}]
  %s1 = inlined_call_operand.hbm [shape: s8[2,768,512], index: 1, kind: input, shape index: {}]
  %s2 = inlined_call_operand.vmem [shape: f32[2,1,512], index: 2, kind: input, shape index: {}]
  %s3 = inlined_call_operand.vmem [shape: f32[2,1,512], index: 3, kind: input, shape index: {}]
  %s4 = inlined_call_operand.hbm [shape: s8[2,512,512], index: 4, kind: input, shape index: {}]
  %s5 = inlined_call_operand.vmem [shape: f32[2,1,512], index: 5, kind: input, shape index: {}]
  %s6 = inlined_call_operand.vmem [shape: f32[2,1,512], index: 6, kind: input, shape index: {}]
  %s7 = inlined_call_operand.hbm [shape: s8[2,512,128], index: 7, kind: input, shape index: {}]
  %s8 = inlined_call_operand.vmem [shape: f32[2,1,128], index: 8, kind: input, shape index: {}]
  %s9 = inlined_call_operand.vmem [shape: f32[2,1,128], index: 9, kind: input, shape index: {}]
  %s10 = inlined_call_operand.hbm [shape: f32[1,2,128], index: 10, kind: output, shape index: {}]
  %s11 = sld [smem:[#allocation0]]
  $region62: #{embedder_forward.1} parent=0
    _
  %s13 = ssub.s32 1, %s11
  %s14 = scalar_select 0, %s13, %s11
  $region1: #{embedder_forward.1} parent=0
    #allocation2 [shape = 'u8[393216]{0}', space=vmem, size = 0x60000, scoped, tag = 'input window, operand 1, single buffered']
    #allocation3 [shape = 's32[1]{0}', space=sflag, size = 0x4, scoped, tag = 'scoped memory for embedder_forward.1']
    #allocation4 [shape = 's32[1]{0}', space=sflag, size = 0x4, scoped, tag = 'scoped memory for embedder_forward.1']
    #allocation5 [shape = 'u8[262144]{0}', space=vmem, size = 0x40000, scoped, tag = 'input window, operand 4, single buffered']
    #allocation6 [shape = 's32[1]{0}', space=sflag, size = 0x4, scoped, tag = 'scoped memory for embedder_forward.1']
    #allocation7 [shape = 'u8[65536]{0}', space=vmem, size = 0x10000, scoped, tag = 'input window, operand 7, single buffered']
    #allocation8 [shape = 'u8[1024]{0}', space=vmem, size = 0x400, scoped, tag = 'output window, operand 0, single buffered']
    %15 = vsyncpa [#allocation3], 0
    %16 = vsyncpa [#allocation6], 0
    %17 = vsyncpa [#allocation4], 0
    // Predicated region
    $region2: #{embedder_forward.1} parent=1 // pred_check
      _
    $region3: #{embedder_forward.1} parent=1 // pred_check_branch
      %19 = sbr.rel (0) target = $region5
    $region4: #{embedder_forward.1} parent=1 // pred_region
      _
    $region5: #{embedder_forward.1} parent=1 // pred_fallthru
      _
    // Predicated region
    $region6: #{embedder_forward.1} parent=1 // pred_check
      _
    $region7: #{embedder_forward.1} parent=1 // pred_check_branch
      %21 = sbr.rel (0) target = $region9
    $region8: #{embedder_forward.1} parent=1 // pred_region
      %s23 = ssub.s32 12288, 12288
      %24 = vsyncadd [#allocation3], %s23
      %s25 = sshll.u32 [#allocation2], 4
      %s26 = int_to_ptr.vmem [resolvable:$true] %s25
      %31 = dma.hbm_to_vmem [thread:$0]  %s1, 12288, %s26, [#allocation3], 512, 512, 32
    $region9: #{embedder_forward.1} parent=1 // pred_fallthru
      _
    // Predicated region
    $region10: #{embedder_forward.1} parent=1 // pred_check
      _
    $region11: #{embedder_forward.1} parent=1 // pred_check_branch
      %33 = sbr.rel (0) target = $region13
    $region12: #{embedder_forward.1} parent=1 // pred_region
      _
    $region13: #{embedder_forward.1} parent=1 // pred_fallthru
      _
    // Predicated region
    $region14: #{embedder_forward.1} parent=1 // pred_check
      _
    $region15: #{embedder_forward.1} parent=1 // pred_check_branch
      %35 = sbr.rel (0) target = $region17
    $region16: #{embedder_forward.1} parent=1 // pred_region
      _
    $region17: #{embedder_forward.1} parent=1 // pred_fallthru
      _
    // Predicated region
    $region18: #{embedder_forward.1} parent=1 // pred_check
      _
    $region19: #{embedder_forward.1} parent=1 // pred_check_branch
      %37 = sbr.rel (0) target = $region21
    $region20: #{embedder_forward.1} parent=1 // pred_region
      %s39 = ssub.s32 8192, 8192
      %40 = vsyncadd [#allocation6], %s39
      %s41 = sshll.u32 [#allocation5], 4
      %s42 = int_to_ptr.vmem [resolvable:$true] %s41
      %47 = dma.hbm_to_vmem [thread:$0]  %s4, 8192, %s42, [#allocation6], 512, 512, 32
    $region21: #{embedder_forward.1} parent=1 // pred_fallthru
      _
    // Predicated region
    $region22: #{embedder_forward.1} parent=1 // pred_check
      _
    $region23: #{embedder_forward.1} parent=1 // pred_check_branch
      %49 = sbr.rel (0) target = $region25
    $region24: #{embedder_forward.1} parent=1 // pred_region
      _
    $region25: #{embedder_forward.1} parent=1 // pred_fallthru
      _
    // Predicated region
    $region26: #{embedder_forward.1} parent=1 // pred_check
      _
    $region27: #{embedder_forward.1} parent=1 // pred_check_branch
      %51 = sbr.rel (0) target = $region29
    $region28: #{embedder_forward.1} parent=1 // pred_region
      _
    $region29: #{embedder_forward.1} parent=1 // pred_fallthru
      _
    // Predicated region
    $region30: #{embedder_forward.1} parent=1 // pred_check
      _
    $region31: #{embedder_forward.1} parent=1 // pred_check_branch
      %53 = sbr.rel (0) target = $region33
    $region32: #{embedder_forward.1} parent=1 // pred_region
      %s55 = ssub.s32 2048, 2048
      %56 = vsyncadd [#allocation6], %s55
      %s57 = sshll.u32 [#allocation7], 4
      %s58 = int_to_ptr.vmem [resolvable:$true] %s57
      %63 = dma.hbm_to_vmem [thread:$0]  %s7, 2048, %s58, [#allocation6], 128, 128, 8
    $region33: #{embedder_forward.1} parent=1 // pred_fallthru
      _
    // Predicated region
    $region34: #{embedder_forward.1} parent=1 // pred_check
      _
    $region35: #{embedder_forward.1} parent=1 // pred_check_branch
      %65 = sbr.rel (0) target = $region37
    $region36: #{embedder_forward.1} parent=1 // pred_region
      _
    $region37: #{embedder_forward.1} parent=1 // pred_fallthru
      _
    // Predicated region
    $region38: #{embedder_forward.1} parent=1 // pred_check
      _
    $region39: #{embedder_forward.1} parent=1 // pred_check_branch
      %67 = sbr.rel (0) target = $region41
    $region40: #{embedder_forward.1} parent=1 // pred_region
      _
    $region41: #{embedder_forward.1} parent=1 // pred_fallthru
      _
    // Predicated region
    $region42: #{embedder_forward.1} parent=1 // pred_check
      _
    $region43: #{embedder_forward.1} parent=1 // pred_check_branch
      %69 = sbr.rel (0) target = $region45
    $region44: #{embedder_forward.1} parent=1 // pred_region
      %70 = dma.done [#allocation3], 12288
    $region45: #{embedder_forward.1} parent=1 // pred_fallthru
      _
    // Predicated region
    $region46: #{embedder_forward.1} parent=1 // pred_check
      _
    $region47: #{embedder_forward.1} parent=1 // pred_check_branch
      %72 = sbr.rel (0) target = $region49
    $region48: #{embedder_forward.1} parent=1 // pred_region
      %73 = dma.done [#allocation6], 8192
    $region49: #{embedder_forward.1} parent=1 // pred_fallthru
      _
    // Predicated region
    $region50: #{embedder_forward.1} parent=1 // pred_check
      _
    $region51: #{embedder_forward.1} parent=1 // pred_check_branch
      %75 = sbr.rel (0) target = $region53
    $region52: #{embedder_forward.1} parent=1 // pred_region
      %76 = dma.done [#allocation6], 2048
    $region53: #{embedder_forward.1} parent=1 // pred_fallthru
      _
    %v78 = vld [vmem:[%s0] sm:$0x3f]
    %v79 = vld [vmem:[#allocation2] sm:$0xff]
    %v80 = vld [vmem:[#allocation2 + $0x8] sm:$0xff]
    %v81 = vld [vmem:[#allocation2 + $0x10] sm:$0xff]
    %v82 = vld [vmem:[#allocation2 + $0x18] sm:$0xff]
    %v83 = vld [vmem:[#allocation2 + $0x20] sm:$0xff]
    %v84 = vld [vmem:[#allocation2 + $0x28] sm:$0xff]
    %v85 = vld [vmem:[#allocation2 + $0x30] sm:$0xff]
    %v86 = vld [vmem:[#allocation2 + $0x38] sm:$0xff]
    %v87 = vld [vmem:[#allocation2 + $0x40] sm:$0xff]
    %v88 = vld [vmem:[#allocation2 + $0x48] sm:$0xff]
    %v89 = vld [vmem:[#allocation2 + $0x50] sm:$0xff]
    %v90 = vld [vmem:[#allocation2 + $0x58] sm:$0xff]
    %v91 = vld [vmem:[#allocation2 + $0x60] sm:$0xff]
    %v92 = vld [vmem:[#allocation2 + $0x68] sm:$0xff]
    %v93 = vld [vmem:[#allocation2 + $0x70] sm:$0xff]
    %v94 = vld [vmem:[#allocation2 + $0x78] sm:$0xff]
    %v95 = vld [vmem:[#allocation2 + $0x80] sm:$0xff]
    %v96 = vld [vmem:[#allocation2 + $0x88] sm:$0xff]
    %v97 = vld [vmem:[#allocation2 + $0x90] sm:$0xff]
    %v98 = vld [vmem:[#allocation2 + $0x98] sm:$0xff]
    %v99 = vld [vmem:[#allocation2 + $0xa0] sm:$0xff]
    %v100 = vld [vmem:[#allocation2 + $0xa8] sm:$0xff]
    %v101 = vld [vmem:[#allocation2 + $0xb0] sm:$0xff]
    %v102 = vld [vmem:[#allocation2 + $0xb8] sm:$0xff]
    %v103 = vld [vmem:[#allocation2 + $0xc0] sm:$0xff]
    %v104 = vld [vmem:[#allocation2 + $0xc8] sm:$0xff]
    %v105 = vld [vmem:[#allocation2 + $0xd0] sm:$0xff]
    %v106 = vld [vmem:[#allocation2 + $0xd8] sm:$0xff]
    %v107 = vld [vmem:[#allocation2 + $0xe0] sm:$0xff]
    %v108 = vld [vmem:[#allocation2 + $0xe8] sm:$0xff]
    %v109 = vld [vmem:[#allocation2 + $0xf0] sm:$0xff]
    %v110 = vld [vmem:[#allocation2 + $0xf8] sm:$0xff]
    %v111 = vld [vmem:[#allocation2 + $0x100] sm:$0xff]
    %v112 = vld [vmem:[#allocation2 + $0x108] sm:$0xff]
    %v113 = vld [vmem:[#allocation2 + $0x110] sm:$0xff]
    %v114 = vld [vmem:[#allocation2 + $0x118] sm:$0xff]
    %v115 = vld [vmem:[#allocation2 + $0x120] sm:$0xff]
    %v116 = vld [vmem:[#allocation2 + $0x128] sm:$0xff]
    %v117 = vld [vmem:[#allocation2 + $0x130] sm:$0xff]
    %v118 = vld [vmem:[#allocation2 + $0x138] sm:$0xff]
    %v119 = vld [vmem:[#allocation2 + $0x140] sm:$0xff]
    %v120 = vld [vmem:[#allocation2 + $0x148] sm:$0xff]
    %v121 = vld [vmem:[#allocation2 + $0x150] sm:$0xff]
    %v122 = vld [vmem:[#allocation2 + $0x158] sm:$0xff]
    %v123 = vld [vmem:[#allocation2 + $0x160] sm:$0xff]
    %v124 = vld [vmem:[#allocation2 + $0x168] sm:$0xff]
    %v125 = vld [vmem:[#allocation2 + $0x170] sm:$0xff]
    %v126 = vld [vmem:[#allocation2 + $0x178] sm:$0xff]
    %v127 = vld [vmem:[#allocation2 + $0x180] sm:$0xff]
    %v128 = vld [vmem:[#allocation2 + $0x188] sm:$0xff]
    %v129 = vld [vmem:[#allocation2 + $0x190] sm:$0xff]
    %v130 = vld [vmem:[#allocation2 + $0x198] sm:$0xff]
    %v131 = vld [vmem:[#allocation2 + $0x1a0] sm:$0xff]
    %v132 = vld [vmem:[#allocation2 + $0x1a8] sm:$0xff]
    %v133 = vld [vmem:[#allocation2 + $0x1b0] sm:$0xff]
    %v134 = vld [vmem:[#allocation2 + $0x1b8] sm:$0xff]
    %v135 = vld [vmem:[#allocation2 + $0x1c0] sm:$0xff]
    %v136 = vld [vmem:[#allocation2 + $0x1c8] sm:$0xff]
    %v137 = vld [vmem:[#allocation2 + $0x1d0] sm:$0xff]
    %v138 = vld [vmem:[#allocation2 + $0x1d8] sm:$0xff]
    %v139 = vld [vmem:[#allocation2 + $0x1e0] sm:$0xff]
    %v140 = vld [vmem:[#allocation2 + $0x1e8] sm:$0xff]
    %v141 = vld [vmem:[#allocation2 + $0x1f0] sm:$0xff]
    %v142 = vld [vmem:[#allocation2 + $0x1f8] sm:$0xff]
    %v143 = vld [vmem:[#allocation2 + $0x200] sm:$0xff]
    %v144 = vld [vmem:[#allocation2 + $0x208] sm:$0xff]
    %v145 = vld [vmem:[#allocation2 + $0x210] sm:$0xff]
    %v146 = vld [vmem:[#allocation2 + $0x218] sm:$0xff]
    %v147 = vld [vmem:[#allocation2 + $0x220] sm:$0xff]
    %v148 = vld [vmem:[#allocation2 + $0x228] sm:$0xff]
    %v149 = vld [vmem:[#allocation2 + $0x230] sm:$0xff]
    %v150 = vld [vmem:[#allocation2 + $0x238] sm:$0xff]
    %v151 = vld [vmem:[#allocation2 + $0x240] sm:$0xff]
    %v152 = vld [vmem:[#allocation2 + $0x248] sm:$0xff]
    %v153 = vld [vmem:[#allocation2 + $0x250] sm:$0xff]
    %v154 = vld [vmem:[#allocation2 + $0x258] sm:$0xff]
    %v155 = vld [vmem:[#allocation2 + $0x260] sm:$0xff]
    %v156 = vld [vmem:[#allocation2 + $0x268] sm:$0xff]
    %v157 = vld [vmem:[#allocation2 + $0x270] sm:$0xff]
    %v158 = vld [vmem:[#allocation2 + $0x278] sm:$0xff]
    %v159 = vld [vmem:[#allocation2 + $0x280] sm:$0xff]
    %v160 = vld [vmem:[#allocation2 + $0x288] sm:$0xff]
    %v161 = vld [vmem:[#allocation2 + $0x290] sm:$0xff]
    %v162 = vld [vmem:[#allocation2 + $0x298] sm:$0xff]
    %v163 = vld [vmem:[#allocation2 + $0x2a0] sm:$0xff]
    %v164 = vld [vmem:[#allocation2 + $0x2a8] sm:$0xff]
    %v165 = vld [vmem:[#allocation2 + $0x2b0] sm:$0xff]
    %v166 = vld [vmem:[#allocation2 + $0x2b8] sm:$0xff]
    %v167 = vld [vmem:[#allocation2 + $0x2c0] sm:$0xff]
    %v168 = vld [vmem:[#allocation2 + $0x2c8] sm:$0xff]
    %v169 = vld [vmem:[#allocation2 + $0x2d0] sm:$0xff]
    %v170 = vld [vmem:[#allocation2 + $0x2d8] sm:$0xff]
    %v171 = vld [vmem:[#allocation2 + $0x2e0] sm:$0xff]
    %v172 = vld [vmem:[#allocation2 + $0x2e8] sm:$0xff]
    %v173 = vld [vmem:[#allocation2 + $0x2f0] sm:$0xff]
    %v174 = vld [vmem:[#allocation2 + $0x2f8] sm:$0xff]
    %v175 = vunpack.c.l.s8.bf16 %v79
    %v176 = vunpack.c.l.s8.bf16 %v80
    %v177 = vunpack.c.l.s8.bf16 %v81
    %v178 = vunpack.c.l.s8.bf16 %v82
    %v179 = vunpack.c.h.s8.bf16 %v79
    %v180 = vunpack.c.h.s8.bf16 %v80
    %v181 = vunpack.c.h.s8.bf16 %v81
    %v182 = vunpack.c.h.s8.bf16 %v82
    %v183 = vunpack.c.l.s8.bf16 %v83
    %v184 = vunpack.c.l.s8.bf16 %v84
    %v185 = vunpack.c.l.s8.bf16 %v85
    %v186 = vunpack.c.l.s8.bf16 %v86
    %v187 = vunpack.c.h.s8.bf16 %v83
    %v188 = vunpack.c.h.s8.bf16 %v84
    %v189 = vunpack.c.h.s8.bf16 %v85
    %v190 = vunpack.c.h.s8.bf16 %v86
    %v191 = vunpack.c.l.s8.bf16 %v87
    %v192 = vunpack.c.l.s8.bf16 %v88
    %v193 = vunpack.c.l.s8.bf16 %v89
    %v194 = vunpack.c.l.s8.bf16 %v90
    %v195 = vunpack.c.h.s8.bf16 %v87
    %v196 = vunpack.c.h.s8.bf16 %v88
    %v197 = vunpack.c.h.s8.bf16 %v89
    %v198 = vunpack.c.h.s8.bf16 %v90
    %v199 = vunpack.c.l.s8.bf16 %v91
    %v200 = vunpack.c.l.s8.bf16 %v92
    %v201 = vunpack.c.l.s8.bf16 %v93
    %v202 = vunpack.c.l.s8.bf16 %v94
    %v203 = vunpack.c.h.s8.bf16 %v91
    %v204 = vunpack.c.h.s8.bf16 %v92
    %v205 = vunpack.c.h.s8.bf16 %v93
    %v206 = vunpack.c.h.s8.bf16 %v94
    %v207 = vunpack.c.l.s8.bf16 %v95
    %v208 = vunpack.c.l.s8.bf16 %v96
    %v209 = vunpack.c.l.s8.bf16 %v97
    %v210 = vunpack.c.l.s8.bf16 %v98
    %v211 = vunpack.c.h.s8.bf16 %v95
    %v212 = vunpack.c.h.s8.bf16 %v96
    %v213 = vunpack.c.h.s8.bf16 %v97
    %v214 = vunpack.c.h.s8.bf16 %v98
    %v215 = vunpack.c.l.s8.bf16 %v99
    %v216 = vunpack.c.l.s8.bf16 %v100
    %v217 = vunpack.c.l.s8.bf16 %v101
    %v218 = vunpack.c.l.s8.bf16 %v102
    %v219 = vunpack.c.h.s8.bf16 %v99
    %v220 = vunpack.c.h.s8.bf16 %v100
    %v221 = vunpack.c.h.s8.bf16 %v101
    %v222 = vunpack.c.h.s8.bf16 %v102
    %v223 = vunpack.c.l.s8.bf16 %v103
    %v224 = vunpack.c.l.s8.bf16 %v104
    %v225 = vunpack.c.l.s8.bf16 %v105
    %v226 = vunpack.c.l.s8.bf16 %v106
    %v227 = vunpack.c.h.s8.bf16 %v103
    %v228 = vunpack.c.h.s8.bf16 %v104
    %v229 = vunpack.c.h.s8.bf16 %v105
    %v230 = vunpack.c.h.s8.bf16 %v106
    %v231 = vunpack.c.l.s8.bf16 %v107
    %v232 = vunpack.c.l.s8.bf16 %v108
    %v233 = vunpack.c.l.s8.bf16 %v109
    %v234 = vunpack.c.l.s8.bf16 %v110
    %v235 = vunpack.c.h.s8.bf16 %v107
    %v236 = vunpack.c.h.s8.bf16 %v108
    %v237 = vunpack.c.h.s8.bf16 %v109
    %v238 = vunpack.c.h.s8.bf16 %v110
    %v239 = vunpack.c.l.s8.bf16 %v111
    %v240 = vunpack.c.l.s8.bf16 %v112
    %v241 = vunpack.c.l.s8.bf16 %v113
    %v242 = vunpack.c.l.s8.bf16 %v114
    %v243 = vunpack.c.h.s8.bf16 %v111
    %v244 = vunpack.c.h.s8.bf16 %v112
    %v245 = vunpack.c.h.s8.bf16 %v113
    %v246 = vunpack.c.h.s8.bf16 %v114
    %v247 = vunpack.c.l.s8.bf16 %v115
    %v248 = vunpack.c.l.s8.bf16 %v116
    %v249 = vunpack.c.l.s8.bf16 %v117
    %v250 = vunpack.c.l.s8.bf16 %v118
    %v251 = vunpack.c.h.s8.bf16 %v115
    %v252 = vunpack.c.h.s8.bf16 %v116
    %v253 = vunpack.c.h.s8.bf16 %v117
    %v254 = vunpack.c.h.s8.bf16 %v118
    %v255 = vunpack.c.l.s8.bf16 %v119
    %v256 = vunpack.c.l.s8.bf16 %v120
    %v257 = vunpack.c.l.s8.bf16 %v121
    %v258 = vunpack.c.l.s8.bf16 %v122
    %v259 = vunpack.c.h.s8.bf16 %v119
    %v260 = vunpack.c.h.s8.bf16 %v120
    %v261 = vunpack.c.h.s8.bf16 %v121
    %v262 = vunpack.c.h.s8.bf16 %v122
    %v263 = vunpack.c.l.s8.bf16 %v123
    %v264 = vunpack.c.l.s8.bf16 %v124
    %v265 = vunpack.c.l.s8.bf16 %v125
    %v266 = vunpack.c.l.s8.bf16 %v126
    %v267 = vunpack.c.h.s8.bf16 %v123
    %v268 = vunpack.c.h.s8.bf16 %v124
    %v269 = vunpack.c.h.s8.bf16 %v125
    %v270 = vunpack.c.h.s8.bf16 %v126
    %v271 = vunpack.c.l.s8.bf16 %v127
    %v272 = vunpack.c.l.s8.bf16 %v128
    %v273 = vunpack.c.l.s8.bf16 %v129
    %v274 = vunpack.c.l.s8.bf16 %v130
    %v275 = vunpack.c.h.s8.bf16 %v127
    %v276 = vunpack.c.h.s8.bf16 %v128
    %v277 = vunpack.c.h.s8.bf16 %v129
    %v278 = vunpack.c.h.s8.bf16 %v130
    %v279 = vunpack.c.l.s8.bf16 %v131
    %v280 = vunpack.c.l.s8.bf16 %v132
    %v281 = vunpack.c.l.s8.bf16 %v133
    %v282 = vunpack.c.l.s8.bf16 %v134
    %v283 = vunpack.c.h.s8.bf16 %v131
    %v284 = vunpack.c.h.s8.bf16 %v132
    %v285 = vunpack.c.h.s8.bf16 %v133
    %v286 = vunpack.c.h.s8.bf16 %v134
    %v287 = vunpack.c.l.s8.bf16 %v135
    %v288 = vunpack.c.l.s8.bf16 %v136
    %v289 = vunpack.c.l.s8.bf16 %v137
    %v290 = vunpack.c.l.s8.bf16 %v138
    %v291 = vunpack.c.h.s8.bf16 %v135
    %v292 = vunpack.c.h.s8.bf16 %v136
    %v293 = vunpack.c.h.s8.bf16 %v137
    %v294 = vunpack.c.h.s8.bf16 %v138
    %v295 = vunpack.c.l.s8.bf16 %v139
    %v296 = vunpack.c.l.s8.bf16 %v140
    %v297 = vunpack.c.l.s8.bf16 %v141
    %v298 = vunpack.c.l.s8.bf16 %v142
    %v299 = vunpack.c.h.s8.bf16 %v139
    %v300 = vunpack.c.h.s8.bf16 %v140
    %v301 = vunpack.c.h.s8.bf16 %v141
    %v302 = vunpack.c.h.s8.bf16 %v142
    %v303 = vunpack.c.l.s8.bf16 %v143
    %v304 = vunpack.c.l.s8.bf16 %v144
    %v305 = vunpack.c.l.s8.bf16 %v145
    %v306 = vunpack.c.l.s8.bf16 %v146
    %v307 = vunpack.c.h.s8.bf16 %v143
    %v308 = vunpack.c.h.s8.bf16 %v144
    %v309 = vunpack.c.h.s8.bf16 %v145
    %v310 = vunpack.c.h.s8.bf16 %v146
    %v311 = vunpack.c.l.s8.bf16 %v147
    %v312 = vunpack.c.l.s8.bf16 %v148
    %v313 = vunpack.c.l.s8.bf16 %v149
    %v314 = vunpack.c.l.s8.bf16 %v150
    %v315 = vunpack.c.h.s8.bf16 %v147
    %v316 = vunpack.c.h.s8.bf16 %v148
    %v317 = vunpack.c.h.s8.bf16 %v149
    %v318 = vunpack.c.h.s8.bf16 %v150
    %v319 = vunpack.c.l.s8.bf16 %v151
    %v320 = vunpack.c.l.s8.bf16 %v152
    %v321 = vunpack.c.l.s8.bf16 %v153
    %v322 = vunpack.c.l.s8.bf16 %v154
    %v323 = vunpack.c.h.s8.bf16 %v151
    %v324 = vunpack.c.h.s8.bf16 %v152
    %v325 = vunpack.c.h.s8.bf16 %v153
    %v326 = vunpack.c.h.s8.bf16 %v154
    %v327 = vunpack.c.l.s8.bf16 %v155
    %v328 = vunpack.c.l.s8.bf16 %v156
    %v329 = vunpack.c.l.s8.bf16 %v157
    %v330 = vunpack.c.l.s8.bf16 %v158
    %v331 = vunpack.c.h.s8.bf16 %v155
    %v332 = vunpack.c.h.s8.bf16 %v156
    %v333 = vunpack.c.h.s8.bf16 %v157
    %v334 = vunpack.c.h.s8.bf16 %v158
    %v335 = vunpack.c.l.s8.bf16 %v159
    %v336 = vunpack.c.l.s8.bf16 %v160
    %v337 = vunpack.c.l.s8.bf16 %v161
    %v338 = vunpack.c.l.s8.bf16 %v162
    %v339 = vunpack.c.h.s8.bf16 %v159
    %v340 = vunpack.c.h.s8.bf16 %v160
    %v341 = vunpack.c.h.s8.bf16 %v161
    %v342 = vunpack.c.h.s8.bf16 %v162
    %v343 = vunpack.c.l.s8.bf16 %v163
    %v344 = vunpack.c.l.s8.bf16 %v164
    %v345 = vunpack.c.l.s8.bf16 %v165
    %v346 = vunpack.c.l.s8.bf16 %v166
    %v347 = vunpack.c.h.s8.bf16 %v163
    %v348 = vunpack.c.h.s8.bf16 %v164
    %v349 = vunpack.c.h.s8.bf16 %v165
    %v350 = vunpack.c.h.s8.bf16 %v166
    %v351 = vunpack.c.l.s8.bf16 %v167
    %v352 = vunpack.c.l.s8.bf16 %v168
    %v353 = vunpack.c.l.s8.bf16 %v169
    %v354 = vunpack.c.l.s8.bf16 %v170
    %v355 = vunpack.c.h.s8.bf16 %v167
    %v356 = vunpack.c.h.s8.bf16 %v168
    %v357 = vunpack.c.h.s8.bf16 %v169
    %v358 = vunpack.c.h.s8.bf16 %v170
    %v359 = vunpack.c.l.s8.bf16 %v171
    %v360 = vunpack.c.l.s8.bf16 %v172
    %v361 = vunpack.c.l.s8.bf16 %v173
    %v362 = vunpack.c.l.s8.bf16 %v174
    %v363 = vunpack.c.h.s8.bf16 %v171
    %v364 = vunpack.c.h.s8.bf16 %v172
    %v365 = vunpack.c.h.s8.bf16 %v173
    %v366 = vunpack.c.h.s8.bf16 %v174
    %v368 = vcombine.high %v78, %v78
    %v370 = vunpack.c.l.s4 1966171168
    %v371 = vunpack.c.0.s8 %v370
    %v372 = vlaneseq
    %v373 = vshrl.u32 %v372, 7
    %v374 = vsub.s32 %v371, %v373
    %v375 = vrot.slane %v78, %v374
    %v377 = vunpack.c.l.s4 1966171168
    %v378 = vunpack.c.0.s8 %v377
    %v379 = vlaneseq
    %v380 = vshrl.u32 %v379, 7
    %v381 = vsub.s32 %v378, %v380
    %v382 = vrot.slane %v368, %v381
    %v383 = vcombine.high %v375, %v375
    %v384 = vcombine.high %v382, %v382
    %v386 = vunpack.c.l.s4 1966171168
    %v387 = vunpack.c.0.s8 %v386
    %v388 = vlaneseq
    %v389 = vshrl.u32 %v388, 7
    %v390 = vsub.s32 %v387, %v389
    %v391 = vrot.slane %v375, %v390
    %v393 = vunpack.c.l.s4 1966171168
    %v394 = vunpack.c.0.s8 %v393
    %v395 = vlaneseq
    %v396 = vshrl.u32 %v395, 7
    %v397 = vsub.s32 %v394, %v396
    %v398 = vrot.slane %v382, %v397
    %v400 = vunpack.c.l.s4 1966171168
    %v401 = vunpack.c.0.s8 %v400
    %v402 = vlaneseq
    %v403 = vshrl.u32 %v402, 7
    %v404 = vsub.s32 %v401, %v403
    %v405 = vrot.slane %v383, %v404
    %v407 = vunpack.c.l.s4 1966171168
    %v408 = vunpack.c.0.s8 %v407
    %v409 = vlaneseq
    %v410 = vshrl.u32 %v409, 7
    %v411 = vsub.s32 %v408, %v410
    %v412 = vrot.slane %v384, %v411
    %v413 = vcombine.high %v391, %v391
    %v414 = vcombine.high %v405, %v405
    %421 = vmatprep.subr.bf16.mxu0 %v176
    %422 = vmatpush1.bf16.msra.mxu0 %v175
    %423 = vmatprep.subr.bf16.mxu0 %v180
    %424 = vmatpush1.bf16.msra.mxu0 %v179
    %425 = vmatprep.subr.bf16.mxu0 %v184
    %426 = vmatpush1.bf16.msra.mxu0 %v183
    %427 = vmatprep.subr.bf16.mxu0 %v188
    %428 = vmatpush1.bf16.msra.mxu0 %v187
    %429 = vmatprep.subr.bf16.mxu0 %v192
    %430 = vmatpush1.bf16.msra.mxu0 %v191
    %431 = vmatprep.subr.bf16.mxu0 %v196
    %432 = vmatpush1.bf16.msra.mxu0 %v195
    %433 = vmatprep.subr.bf16.mxu0 %v200
    %434 = vmatpush1.bf16.msra.mxu0 %v199
    %435 = vmatprep.subr.bf16.mxu0 %v204
    %436 = vmatpush1.bf16.msra.mxu0 %v203
    %437 = vmatprep.subr.bf16.mxu0 %v208
    %438 = vmatpush1.bf16.msra.mxu0 %v207
    %439 = vmatprep.subr.bf16.mxu0 %v212
    %440 = vmatpush1.bf16.msra.mxu0 %v211
    %441 = vmatprep.subr.bf16.mxu0 %v216
    %442 = vmatpush1.bf16.msra.mxu0 %v215
    %443 = vmatprep.subr.bf16.mxu0 %v220
    %444 = vmatpush1.bf16.msra.mxu0 %v219
    %445 = vmatprep.subr.bf16.mxu0 %v224
    %446 = vmatpush1.bf16.msra.mxu0 %v223
    %447 = vmatprep.subr.bf16.mxu0 %v228
    %448 = vmatpush1.bf16.msra.mxu0 %v227
    %449 = vmatprep.subr.bf16.mxu0 %v232
    %450 = vmatpush1.bf16.msra.mxu0 %v231
    %451 = vmatprep.subr.bf16.mxu0 %v236
    %452 = vmatpush1.bf16.msra.mxu0 %v235
    %453 = vmatprep.mubr.bf16.mxu0 %v405
    %454 = vmatmul.mubr.bf16.gmra.mrb[0].mxu0 %v391
    %v455 = vpop.f32.mrb[0].mxu0
    %v456 = vadd.f32 0.0, %v455
    %v457 = vpop.f32.mrb[0].mxu0
    %v458 = vadd.f32 0.0, %v457
    %v459 = vpop.f32.mrb[0].mxu0
    %v460 = vpop.f32.mrb[0].mxu0
    %461 = vdwg.mxu0
    %462 = vmatprep.subr.bf16.mxu0 %v240
    %463 = vmatpush1.bf16.msra.mxu0 %v239
    %464 = vmatprep.subr.bf16.mxu0 %v244
    %465 = vmatpush1.bf16.msra.mxu0 %v243
    %466 = vmatprep.subr.bf16.mxu0 %v248
    %467 = vmatpush1.bf16.msra.mxu0 %v247
    %468 = vmatprep.subr.bf16.mxu0 %v252
    %469 = vmatpush1.bf16.msra.mxu0 %v251
    %470 = vmatprep.subr.bf16.mxu0 %v256
    %471 = vmatpush1.bf16.msra.mxu0 %v255
    %472 = vmatprep.subr.bf16.mxu0 %v260
    %473 = vmatpush1.bf16.msra.mxu0 %v259
    %474 = vmatprep.subr.bf16.mxu0 %v264
    %475 = vmatpush1.bf16.msra.mxu0 %v263
    %476 = vmatprep.subr.bf16.mxu0 %v268
    %477 = vmatpush1.bf16.msra.mxu0 %v267
    %478 = vmatprep.subr.bf16.mxu0 %v272
    %479 = vmatpush1.bf16.msra.mxu0 %v271
    %480 = vmatprep.subr.bf16.mxu0 %v276
    %481 = vmatpush1.bf16.msra.mxu0 %v275
    %482 = vmatprep.subr.bf16.mxu0 %v280
    %483 = vmatpush1.bf16.msra.mxu0 %v279
    %484 = vmatprep.subr.bf16.mxu0 %v284
    %485 = vmatpush1.bf16.msra.mxu0 %v283
    %486 = vmatprep.subr.bf16.mxu0 %v288
    %487 = vmatpush1.bf16.msra.mxu0 %v287
    %488 = vmatprep.subr.bf16.mxu0 %v292
    %489 = vmatpush1.bf16.msra.mxu0 %v291
    %490 = vmatprep.subr.bf16.mxu0 %v296
    %491 = vmatpush1.bf16.msra.mxu0 %v295
    %492 = vmatprep.subr.bf16.mxu0 %v300
    %493 = vmatpush1.bf16.msra.mxu0 %v299
    %494 = vmatprep.mubr.bf16.mxu0 %v414
    %495 = vmatmul.mubr.bf16.gmra.mrb[0].mxu0 %v413
    %v496 = vpop.f32.mrb[0].mxu0
    %v497 = vadd.f32 %v456, %v496
    %v498 = vpop.f32.mrb[0].mxu0
    %v499 = vadd.f32 %v458, %v498
    %v500 = vpop.f32.mrb[0].mxu0
    %v501 = vpop.f32.mrb[0].mxu0
    %502 = vdwg.mxu0
    %503 = vmatprep.subr.bf16.mxu0 %v304
    %504 = vmatpush1.bf16.msra.mxu0 %v303
    %505 = vmatprep.subr.bf16.mxu0 %v308
    %506 = vmatpush1.bf16.msra.mxu0 %v307
    %507 = vmatprep.subr.bf16.mxu0 %v312
    %508 = vmatpush1.bf16.msra.mxu0 %v311
    %509 = vmatprep.subr.bf16.mxu0 %v316
    %510 = vmatpush1.bf16.msra.mxu0 %v315
    %511 = vmatprep.subr.bf16.mxu0 %v320
    %512 = vmatpush1.bf16.msra.mxu0 %v319
    %513 = vmatprep.subr.bf16.mxu0 %v324
    %514 = vmatpush1.bf16.msra.mxu0 %v323
    %515 = vmatprep.subr.bf16.mxu0 %v328
    %516 = vmatpush1.bf16.msra.mxu0 %v327
    %517 = vmatprep.subr.bf16.mxu0 %v332
    %518 = vmatpush1.bf16.msra.mxu0 %v331
    %519 = vmatprep.subr.bf16.mxu0 %v336
    %520 = vmatpush1.bf16.msra.mxu0 %v335
    %521 = vmatprep.subr.bf16.mxu0 %v340
    %522 = vmatpush1.bf16.msra.mxu0 %v339
    %523 = vmatprep.subr.bf16.mxu0 %v344
    %524 = vmatpush1.bf16.msra.mxu0 %v343
    %525 = vmatprep.subr.bf16.mxu0 %v348
    %526 = vmatpush1.bf16.msra.mxu0 %v347
    %527 = vmatprep.subr.bf16.mxu0 %v352
    %528 = vmatpush1.bf16.msra.mxu0 %v351
    %529 = vmatprep.subr.bf16.mxu0 %v356
    %530 = vmatpush1.bf16.msra.mxu0 %v355
    %531 = vmatprep.subr.bf16.mxu0 %v360
    %532 = vmatpush1.bf16.msra.mxu0 %v359
    %533 = vmatprep.subr.bf16.mxu0 %v364
    %534 = vmatpush1.bf16.msra.mxu0 %v363
    %535 = vmatprep.mubr.bf16.mxu0 %v412
    %536 = vmatmul.mubr.bf16.gmra.mrb[0].mxu0 %v398
    %v537 = vpop.f32.mrb[0].mxu0
    %v538 = vadd.f32 %v497, %v537
    %v539 = vpop.f32.mrb[0].mxu0
    %v540 = vadd.f32 %v499, %v539
    %v541 = vpop.f32.mrb[0].mxu0
    %v542 = vpop.f32.mrb[0].mxu0
    %543 = vdwg.mxu0
    %544 = vmatprep.subr.bf16.mxu0 %v178
    %545 = vmatpush1.bf16.msra.mxu0 %v177
    %546 = vmatprep.subr.bf16.mxu0 %v182
    %547 = vmatpush1.bf16.msra.mxu0 %v181
    %548 = vmatprep.subr.bf16.mxu0 %v186
    %549 = vmatpush1.bf16.msra.mxu0 %v185
    %550 = vmatprep.subr.bf16.mxu0 %v190
    %551 = vmatpush1.bf16.msra.mxu0 %v189
    %552 = vmatprep.subr.bf16.mxu0 %v194
    %553 = vmatpush1.bf16.msra.mxu0 %v193
    %554 = vmatprep.subr.bf16.mxu0 %v198
    %555 = vmatpush1.bf16.msra.mxu0 %v197
    %556 = vmatprep.subr.bf16.mxu0 %v202
    %557 = vmatpush1.bf16.msra.mxu0 %v201
    %558 = vmatprep.subr.bf16.mxu0 %v206
    %559 = vmatpush1.bf16.msra.mxu0 %v205
    %560 = vmatprep.subr.bf16.mxu0 %v210
    %561 = vmatpush1.bf16.msra.mxu0 %v209
    %562 = vmatprep.subr.bf16.mxu0 %v214
    %563 = vmatpush1.bf16.msra.mxu0 %v213
    %564 = vmatprep.subr.bf16.mxu0 %v218
    %565 = vmatpush1.bf16.msra.mxu0 %v217
    %566 = vmatprep.subr.bf16.mxu0 %v222
    %567 = vmatpush1.bf16.msra.mxu0 %v221
    %568 = vmatprep.subr.bf16.mxu0 %v226
    %569 = vmatpush1.bf16.msra.mxu0 %v225
    %570 = vmatprep.subr.bf16.mxu0 %v230
    %571 = vmatpush1.bf16.msra.mxu0 %v229
    %572 = vmatprep.subr.bf16.mxu0 %v234
    %573 = vmatpush1.bf16.msra.mxu0 %v233
    %574 = vmatprep.subr.bf16.mxu0 %v238
    %575 = vmatpush1.bf16.msra.mxu0 %v237
    %576 = vmatprep.mubr.bf16.mxu0 %v405
    %577 = vmatmul.mubr.bf16.gmra.mrb[0].mxu0 %v391
    %v578 = vpop.f32.mrb[0].mxu0
    %v579 = vadd.f32 0.0, %v578
    %v580 = vpop.f32.mrb[0].mxu0
    %v581 = vadd.f32 0.0, %v580
    %v582 = vpop.f32.mrb[0].mxu0
    %v583 = vpop.f32.mrb[0].mxu0
    %584 = vdwg.mxu0
    %585 = vmatprep.subr.bf16.mxu0 %v242
    %586 = vmatpush1.bf16.msra.mxu0 %v241
    %587 = vmatprep.subr.bf16.mxu0 %v246
    %588 = vmatpush1.bf16.msra.mxu0 %v245
    %589 = vmatprep.subr.bf16.mxu0 %v250
    %590 = vmatpush1.bf16.msra.mxu0 %v249
    %591 = vmatprep.subr.bf16.mxu0 %v254
    %592 = vmatpush1.bf16.msra.mxu0 %v253
    %593 = vmatprep.subr.bf16.mxu0 %v258
    %594 = vmatpush1.bf16.msra.mxu0 %v257
    %595 = vmatprep.subr.bf16.mxu0 %v262
    %596 = vmatpush1.bf16.msra.mxu0 %v261
    %597 = vmatprep.subr.bf16.mxu0 %v266
    %598 = vmatpush1.bf16.msra.mxu0 %v265
    %599 = vmatprep.subr.bf16.mxu0 %v270
    %600 = vmatpush1.bf16.msra.mxu0 %v269
    %601 = vmatprep.subr.bf16.mxu0 %v274
    %602 = vmatpush1.bf16.msra.mxu0 %v273
    %603 = vmatprep.subr.bf16.mxu0 %v278
    %604 = vmatpush1.bf16.msra.mxu0 %v277
    %605 = vmatprep.subr.bf16.mxu0 %v282
    %606 = vmatpush1.bf16.msra.mxu0 %v281
    %607 = vmatprep.subr.bf16.mxu0 %v286
    %608 = vmatpush1.bf16.msra.mxu0 %v285
    %609 = vmatprep.subr.bf16.mxu0 %v290
    %610 = vmatpush1.bf16.msra.mxu0 %v289
    %611 = vmatprep.subr.bf16.mxu0 %v294
    %612 = vmatpush1.bf16.msra.mxu0 %v293
    %613 = vmatprep.subr.bf16.mxu0 %v298
    %614 = vmatpush1.bf16.msra.mxu0 %v297
    %615 = vmatprep.subr.bf16.mxu0 %v302
    %616 = vmatpush1.bf16.msra.mxu0 %v301
    %617 = vmatprep.mubr.bf16.mxu0 %v414
    %618 = vmatmul.mubr.bf16.gmra.mrb[0].mxu0 %v413
    %v619 = vpop.f32.mrb[0].mxu0
    %v620 = vadd.f32 %v579, %v619
    %v621 = vpop.f32.mrb[0].mxu0
    %v622 = vadd.f32 %v581, %v621
    %v623 = vpop.f32.mrb[0].mxu0
    %v624 = vpop.f32.mrb[0].mxu0
    %625 = vdwg.mxu0
    %626 = vmatprep.subr.bf16.mxu0 %v306
    %627 = vmatpush1.bf16.msra.mxu0 %v305
    %628 = vmatprep.subr.bf16.mxu0 %v310
    %629 = vmatpush1.bf16.msra.mxu0 %v309
    %630 = vmatprep.subr.bf16.mxu0 %v314
    %631 = vmatpush1.bf16.msra.mxu0 %v313
    %632 = vmatprep.subr.bf16.mxu0 %v318
    %633 = vmatpush1.bf16.msra.mxu0 %v317
    %634 = vmatprep.subr.bf16.mxu0 %v322
    %635 = vmatpush1.bf16.msra.mxu0 %v321
    %636 = vmatprep.subr.bf16.mxu0 %v326
    %637 = vmatpush1.bf16.msra.mxu0 %v325
    %638 = vmatprep.subr.bf16.mxu0 %v330
    %639 = vmatpush1.bf16.msra.mxu0 %v329
    %640 = vmatprep.subr.bf16.mxu0 %v334
    %641 = vmatpush1.bf16.msra.mxu0 %v333
    %642 = vmatprep.subr.bf16.mxu0 %v338
    %643 = vmatpush1.bf16.msra.mxu0 %v337
    %644 = vmatprep.subr.bf16.mxu0 %v342
    %645 = vmatpush1.bf16.msra.mxu0 %v341
    %646 = vmatprep.subr.bf16.mxu0 %v346
    %647 = vmatpush1.bf16.msra.mxu0 %v345
    %648 = vmatprep.subr.bf16.mxu0 %v350
    %649 = vmatpush1.bf16.msra.mxu0 %v349
    %650 = vmatprep.subr.bf16.mxu0 %v354
    %651 = vmatpush1.bf16.msra.mxu0 %v353
    %652 = vmatprep.subr.bf16.mxu0 %v358
    %653 = vmatpush1.bf16.msra.mxu0 %v357
    %654 = vmatprep.subr.bf16.mxu0 %v362
    %655 = vmatpush1.bf16.msra.mxu0 %v361
    %656 = vmatprep.subr.bf16.mxu0 %v366
    %657 = vmatpush1.bf16.msra.mxu0 %v365
    %658 = vmatprep.mubr.bf16.mxu0 %v412
    %659 = vmatmul.mubr.bf16.gmra.mrb[0].mxu0 %v398
    %v660 = vpop.f32.mrb[0].mxu0
    %v661 = vadd.f32 %v620, %v660
    %v662 = vpop.f32.mrb[0].mxu0
    %v663 = vadd.f32 %v622, %v662
    %v664 = vpop.f32.mrb[0].mxu0
    %v665 = vpop.f32.mrb[0].mxu0
    %666 = vdwg.mxu0
    %v667 = vld [vmem:[%s2] sm:$0xf]
    %v669 = vlaneseq
    %v670 = vshrl.u32 %v669, 7
    %v671 = vsub.s32 0, %v670
    %v672 = vrot.slane %v667, %v671
    %v673 = vlaneseq
    %v674 = vshrl.u32 %v673, 7
    %v675 = vsub.s32 1, %v674
    %v676 = vrot.slane %v667, %v675
    %v677 = vlaneseq
    %v678 = vshrl.u32 %v677, 7
    %v679 = vsub.s32 2, %v678
    %v680 = vrot.slane %v667, %v679
    %v681 = vlaneseq
    %v682 = vshrl.u32 %v681, 7
    %v683 = vsub.s32 3, %v682
    %v684 = vrot.slane %v667, %v683
    %v689 = vmul.f32 %v538, %v672
    %v690 = vmul.f32 %v540, %v676
    %v691 = vmul.f32 %v661, %v680
    %v692 = vmul.f32 %v663, %v684
    %v693 = vld [vmem:[%s3] sm:$0xf]
    %v695 = vlaneseq
    %v696 = vshrl.u32 %v695, 7
    %v697 = vsub.s32 0, %v696
    %v698 = vrot.slane %v693, %v697
    %v699 = vlaneseq
    %v700 = vshrl.u32 %v699, 7
    %v701 = vsub.s32 1, %v700
    %v702 = vrot.slane %v693, %v701
    %v703 = vlaneseq
    %v704 = vshrl.u32 %v703, 7
    %v705 = vsub.s32 2, %v704
    %v706 = vrot.slane %v693, %v705
    %v707 = vlaneseq
    %v708 = vshrl.u32 %v707, 7
    %v709 = vsub.s32 3, %v708
    %v710 = vrot.slane %v693, %v709
    %v715 = vadd.f32 %v689, %v698
    %v716 = vadd.f32 %v690, %v702
    %v717 = vadd.f32 %v691, %v706
    %v718 = vadd.f32 %v692, %v710
    %v719 = vpack.c.bf16 %v715, %v715
    %v720 = vpack.c.bf16 %v716, %v716
    %v721 = vpack.c.bf16 %v717, %v717
    %v722 = vpack.c.bf16 %v718, %v718
    %v723 = vld [vmem:[#allocation5] sm:$0xff]
    %v724 = vld [vmem:[#allocation5 + $0x8] sm:$0xff]
    %v725 = vld [vmem:[#allocation5 + $0x10] sm:$0xff]
    %v726 = vld [vmem:[#allocation5 + $0x18] sm:$0xff]
    %v727 = vld [vmem:[#allocation5 + $0x20] sm:$0xff]
    %v728 = vld [vmem:[#allocation5 + $0x28] sm:$0xff]
    %v729 = vld [vmem:[#allocation5 + $0x30] sm:$0xff]
    %v730 = vld [vmem:[#allocation5 + $0x38] sm:$0xff]
    %v731 = vld [vmem:[#allocation5 + $0x40] sm:$0xff]
    %v732 = vld [vmem:[#allocation5 + $0x48] sm:$0xff]
    %v733 = vld [vmem:[#allocation5 + $0x50] sm:$0xff]
    %v734 = vld [vmem:[#allocation5 + $0x58] sm:$0xff]
    %v735 = vld [vmem:[#allocation5 + $0x60] sm:$0xff]
    %v736 = vld [vmem:[#allocation5 + $0x68] sm:$0xff]
    %v737 = vld [vmem:[#allocation5 + $0x70] sm:$0xff]
    %v738 = vld [vmem:[#allocation5 + $0x78] sm:$0xff]
    %v739 = vld [vmem:[#allocation5 + $0x80] sm:$0xff]
    %v740 = vld [vmem:[#allocation5 + $0x88] sm:$0xff]
    %v741 = vld [vmem:[#allocation5 + $0x90] sm:$0xff]
    %v742 = vld [vmem:[#allocation5 + $0x98] sm:$0xff]
    %v743 = vld [vmem:[#allocation5 + $0xa0] sm:$0xff]
    %v744 = vld [vmem:[#allocation5 + $0xa8] sm:$0xff]
    %v745 = vld [vmem:[#allocation5 + $0xb0] sm:$0xff]
    %v746 = vld [vmem:[#allocation5 + $0xb8] sm:$0xff]
    %v747 = vld [vmem:[#allocation5 + $0xc0] sm:$0xff]
    %v748 = vld [vmem:[#allocation5 + $0xc8] sm:$0xff]
    %v749 = vld [vmem:[#allocation5 + $0xd0] sm:$0xff]
    %v750 = vld [vmem:[#allocation5 + $0xd8] sm:$0xff]
    %v751 = vld [vmem:[#allocation5 + $0xe0] sm:$0xff]
    %v752 = vld [vmem:[#allocation5 + $0xe8] sm:$0xff]
    %v753 = vld [vmem:[#allocation5 + $0xf0] sm:$0xff]
    %v754 = vld [vmem:[#allocation5 + $0xf8] sm:$0xff]
    %v755 = vld [vmem:[#allocation5 + $0x100] sm:$0xff]
    %v756 = vld [vmem:[#allocation5 + $0x108] sm:$0xff]
    %v757 = vld [vmem:[#allocation5 + $0x110] sm:$0xff]
    %v758 = vld [vmem:[#allocation5 + $0x118] sm:$0xff]
    %v759 = vld [vmem:[#allocation5 + $0x120] sm:$0xff]
    %v760 = vld [vmem:[#allocation5 + $0x128] sm:$0xff]
    %v761 = vld [vmem:[#allocation5 + $0x130] sm:$0xff]
    %v762 = vld [vmem:[#allocation5 + $0x138] sm:$0xff]
    %v763 = vld [vmem:[#allocation5 + $0x140] sm:$0xff]
    %v764 = vld [vmem:[#allocation5 + $0x148] sm:$0xff]
    %v765 = vld [vmem:[#allocation5 + $0x150] sm:$0xff]
    %v766 = vld [vmem:[#allocation5 + $0x158] sm:$0xff]
    %v767 = vld [vmem:[#allocation5 + $0x160] sm:$0xff]
    %v768 = vld [vmem:[#allocation5 + $0x168] sm:$0xff]
    %v769 = vld [vmem:[#allocation5 + $0x170] sm:$0xff]
    %v770 = vld [vmem:[#allocation5 + $0x178] sm:$0xff]
    %v771 = vld [vmem:[#allocation5 + $0x180] sm:$0xff]
    %v772 = vld [vmem:[#allocation5 + $0x188] sm:$0xff]
    %v773 = vld [vmem:[#allocation5 + $0x190] sm:$0xff]
    %v774 = vld [vmem:[#allocation5 + $0x198] sm:$0xff]
    %v775 = vld [vmem:[#allocation5 + $0x1a0] sm:$0xff]
    %v776 = vld [vmem:[#allocation5 + $0x1a8] sm:$0xff]
    %v777 = vld [vmem:[#allocation5 + $0x1b0] sm:$0xff]
    %v778 = vld [vmem:[#allocation5 + $0x1b8] sm:$0xff]
    %v779 = vld [vmem:[#allocation5 + $0x1c0] sm:$0xff]
    %v780 = vld [vmem:[#allocation5 + $0x1c8] sm:$0xff]
    %v781 = vld [vmem:[#allocation5 + $0x1d0] sm:$0xff]
    %v782 = vld [vmem:[#allocation5 + $0x1d8] sm:$0xff]
    %v783 = vld [vmem:[#allocation5 + $0x1e0] sm:$0xff]
    %v784 = vld [vmem:[#allocation5 + $0x1e8] sm:$0xff]
    %v785 = vld [vmem:[#allocation5 + $0x1f0] sm:$0xff]
    %v786 = vld [vmem:[#allocation5 + $0x1f8] sm:$0xff]
    %v787 = vunpack.c.l.s8.bf16 %v723
    %v788 = vunpack.c.l.s8.bf16 %v724
    %v789 = vunpack.c.l.s8.bf16 %v725
    %v790 = vunpack.c.l.s8.bf16 %v726
    %v791 = vunpack.c.h.s8.bf16 %v723
    %v792 = vunpack.c.h.s8.bf16 %v724
    %v793 = vunpack.c.h.s8.bf16 %v725
    %v794 = vunpack.c.h.s8.bf16 %v726
    %v795 = vunpack.c.l.s8.bf16 %v727
    %v796 = vunpack.c.l.s8.bf16 %v728
    %v797 = vunpack.c.l.s8.bf16 %v729
    %v798 = vunpack.c.l.s8.bf16 %v730
    %v799 = vunpack.c.h.s8.bf16 %v727
    %v800 = vunpack.c.h.s8.bf16 %v728
    %v801 = vunpack.c.h.s8.bf16 %v729
    %v802 = vunpack.c.h.s8.bf16 %v730
    %v803 = vunpack.c.l.s8.bf16 %v731
    %v804 = vunpack.c.l.s8.bf16 %v732
    %v805 = vunpack.c.l.s8.bf16 %v733
    %v806 = vunpack.c.l.s8.bf16 %v734
    %v807 = vunpack.c.h.s8.bf16 %v731
    %v808 = vunpack.c.h.s8.bf16 %v732
    %v809 = vunpack.c.h.s8.bf16 %v733
    %v810 = vunpack.c.h.s8.bf16 %v734
    %v811 = vunpack.c.l.s8.bf16 %v735
    %v812 = vunpack.c.l.s8.bf16 %v736
    %v813 = vunpack.c.l.s8.bf16 %v737
    %v814 = vunpack.c.l.s8.bf16 %v738
    %v815 = vunpack.c.h.s8.bf16 %v735
    %v816 = vunpack.c.h.s8.bf16 %v736
    %v817 = vunpack.c.h.s8.bf16 %v737
    %v818 = vunpack.c.h.s8.bf16 %v738
    %v819 = vunpack.c.l.s8.bf16 %v739
    %v820 = vunpack.c.l.s8.bf16 %v740
    %v821 = vunpack.c.l.s8.bf16 %v741
    %v822 = vunpack.c.l.s8.bf16 %v742
    %v823 = vunpack.c.h.s8.bf16 %v739
    %v824 = vunpack.c.h.s8.bf16 %v740
    %v825 = vunpack.c.h.s8.bf16 %v741
    %v826 = vunpack.c.h.s8.bf16 %v742
    %v827 = vunpack.c.l.s8.bf16 %v743
    %v828 = vunpack.c.l.s8.bf16 %v744
    %v829 = vunpack.c.l.s8.bf16 %v745
    %v830 = vunpack.c.l.s8.bf16 %v746
    %v831 = vunpack.c.h.s8.bf16 %v743
    %v832 = vunpack.c.h.s8.bf16 %v744
    %v833 = vunpack.c.h.s8.bf16 %v745
    %v834 = vunpack.c.h.s8.bf16 %v746
    %v835 = vunpack.c.l.s8.bf16 %v747
    %v836 = vunpack.c.l.s8.bf16 %v748
    %v837 = vunpack.c.l.s8.bf16 %v749
    %v838 = vunpack.c.l.s8.bf16 %v750
    %v839 = vunpack.c.h.s8.bf16 %v747
    %v840 = vunpack.c.h.s8.bf16 %v748
    %v841 = vunpack.c.h.s8.bf16 %v749
    %v842 = vunpack.c.h.s8.bf16 %v750
    %v843 = vunpack.c.l.s8.bf16 %v751
    %v844 = vunpack.c.l.s8.bf16 %v752
    %v845 = vunpack.c.l.s8.bf16 %v753
    %v846 = vunpack.c.l.s8.bf16 %v754
    %v847 = vunpack.c.h.s8.bf16 %v751
    %v848 = vunpack.c.h.s8.bf16 %v752
    %v849 = vunpack.c.h.s8.bf16 %v753
    %v850 = vunpack.c.h.s8.bf16 %v754
    %v851 = vunpack.c.l.s8.bf16 %v755
    %v852 = vunpack.c.l.s8.bf16 %v756
    %v853 = vunpack.c.l.s8.bf16 %v757
    %v854 = vunpack.c.l.s8.bf16 %v758
    %v855 = vunpack.c.h.s8.bf16 %v755
    %v856 = vunpack.c.h.s8.bf16 %v756
    %v857 = vunpack.c.h.s8.bf16 %v757
    %v858 = vunpack.c.h.s8.bf16 %v758
    %v859 = vunpack.c.l.s8.bf16 %v759
    %v860 = vunpack.c.l.s8.bf16 %v760
    %v861 = vunpack.c.l.s8.bf16 %v761
    %v862 = vunpack.c.l.s8.bf16 %v762
    %v863 = vunpack.c.h.s8.bf16 %v759
    %v864 = vunpack.c.h.s8.bf16 %v760
    %v865 = vunpack.c.h.s8.bf16 %v761
    %v866 = vunpack.c.h.s8.bf16 %v762
    %v867 = vunpack.c.l.s8.bf16 %v763
    %v868 = vunpack.c.l.s8.bf16 %v764
    %v869 = vunpack.c.l.s8.bf16 %v765
    %v870 = vunpack.c.l.s8.bf16 %v766
    %v871 = vunpack.c.h.s8.bf16 %v763
    %v872 = vunpack.c.h.s8.bf16 %v764
    %v873 = vunpack.c.h.s8.bf16 %v765
    %v874 = vunpack.c.h.s8.bf16 %v766
    %v875 = vunpack.c.l.s8.bf16 %v767
    %v876 = vunpack.c.l.s8.bf16 %v768
    %v877 = vunpack.c.l.s8.bf16 %v769
    %v878 = vunpack.c.l.s8.bf16 %v770
    %v879 = vunpack.c.h.s8.bf16 %v767
    %v880 = vunpack.c.h.s8.bf16 %v768
    %v881 = vunpack.c.h.s8.bf16 %v769
    %v882 = vunpack.c.h.s8.bf16 %v770
    %v883 = vunpack.c.l.s8.bf16 %v771
    %v884 = vunpack.c.l.s8.bf16 %v772
    %v885 = vunpack.c.l.s8.bf16 %v773
    %v886 = vunpack.c.l.s8.bf16 %v774
    %v887 = vunpack.c.h.s8.bf16 %v771
    %v888 = vunpack.c.h.s8.bf16 %v772
    %v889 = vunpack.c.h.s8.bf16 %v773
    %v890 = vunpack.c.h.s8.bf16 %v774
    %v891 = vunpack.c.l.s8.bf16 %v775
    %v892 = vunpack.c.l.s8.bf16 %v776
    %v893 = vunpack.c.l.s8.bf16 %v777
    %v894 = vunpack.c.l.s8.bf16 %v778
    %v895 = vunpack.c.h.s8.bf16 %v775
    %v896 = vunpack.c.h.s8.bf16 %v776
    %v897 = vunpack.c.h.s8.bf16 %v777
    %v898 = vunpack.c.h.s8.bf16 %v778
    %v899 = vunpack.c.l.s8.bf16 %v779
    %v900 = vunpack.c.l.s8.bf16 %v780
    %v901 = vunpack.c.l.s8.bf16 %v781
    %v902 = vunpack.c.l.s8.bf16 %v782
    %v903 = vunpack.c.h.s8.bf16 %v779
    %v904 = vunpack.c.h.s8.bf16 %v780
    %v905 = vunpack.c.h.s8.bf16 %v781
    %v906 = vunpack.c.h.s8.bf16 %v782
    %v907 = vunpack.c.l.s8.bf16 %v783
    %v908 = vunpack.c.l.s8.bf16 %v784
    %v909 = vunpack.c.l.s8.bf16 %v785
    %v910 = vunpack.c.l.s8.bf16 %v786
    %v911 = vunpack.c.h.s8.bf16 %v783
    %v912 = vunpack.c.h.s8.bf16 %v784
    %v913 = vunpack.c.h.s8.bf16 %v785
    %v914 = vunpack.c.h.s8.bf16 %v786
    %915 = vmatprep.subr.bf16.mxu0 %v788
    %916 = vmatpush1.bf16.msra.mxu0 %v787
    %917 = vmatprep.subr.bf16.mxu0 %v792
    %918 = vmatpush1.bf16.msra.mxu0 %v791
    %919 = vmatprep.subr.bf16.mxu0 %v796
    %920 = vmatpush1.bf16.msra.mxu0 %v795
    %921 = vmatprep.subr.bf16.mxu0 %v800
    %922 = vmatpush1.bf16.msra.mxu0 %v799
    %923 = vmatprep.subr.bf16.mxu0 %v804
    %924 = vmatpush1.bf16.msra.mxu0 %v803
    %925 = vmatprep.subr.bf16.mxu0 %v808
    %926 = vmatpush1.bf16.msra.mxu0 %v807
    %927 = vmatprep.subr.bf16.mxu0 %v812
    %928 = vmatpush1.bf16.msra.mxu0 %v811
    %929 = vmatprep.subr.bf16.mxu0 %v816
    %930 = vmatpush1.bf16.msra.mxu0 %v815
    %931 = vmatprep.subr.bf16.mxu0 %v820
    %932 = vmatpush1.bf16.msra.mxu0 %v819
    %933 = vmatprep.subr.bf16.mxu0 %v824
    %934 = vmatpush1.bf16.msra.mxu0 %v823
    %935 = vmatprep.subr.bf16.mxu0 %v828
    %936 = vmatpush1.bf16.msra.mxu0 %v827
    %937 = vmatprep.subr.bf16.mxu0 %v832
    %938 = vmatpush1.bf16.msra.mxu0 %v831
    %939 = vmatprep.subr.bf16.mxu0 %v836
    %940 = vmatpush1.bf16.msra.mxu0 %v835
    %941 = vmatprep.subr.bf16.mxu0 %v840
    %942 = vmatpush1.bf16.msra.mxu0 %v839
    %943 = vmatprep.subr.bf16.mxu0 %v844
    %944 = vmatpush1.bf16.msra.mxu0 %v843
    %945 = vmatprep.subr.bf16.mxu0 %v848
    %946 = vmatpush1.bf16.msra.mxu0 %v847
    %947 = vmatprep.mubr.bf16.mxu0 %v720
    %948 = vmatmul.mubr.bf16.gmra.mrb[0].mxu0 %v719
    %v949 = vpop.f32.mrb[0].mxu0
    %v950 = vadd.f32 0.0, %v949
    %v951 = vpop.f32.mrb[0].mxu0
    %v952 = vadd.f32 0.0, %v951
    %v953 = vpop.f32.mrb[0].mxu0
    %v954 = vpop.f32.mrb[0].mxu0
    %955 = vdwg.mxu0
    %956 = vmatprep.subr.bf16.mxu0 %v852
    %957 = vmatpush1.bf16.msra.mxu0 %v851
    %958 = vmatprep.subr.bf16.mxu0 %v856
    %959 = vmatpush1.bf16.msra.mxu0 %v855
    %960 = vmatprep.subr.bf16.mxu0 %v860
    %961 = vmatpush1.bf16.msra.mxu0 %v859
    %962 = vmatprep.subr.bf16.mxu0 %v864
    %963 = vmatpush1.bf16.msra.mxu0 %v863
    %964 = vmatprep.subr.bf16.mxu0 %v868
    %965 = vmatpush1.bf16.msra.mxu0 %v867
    %966 = vmatprep.subr.bf16.mxu0 %v872
    %967 = vmatpush1.bf16.msra.mxu0 %v871
    %968 = vmatprep.subr.bf16.mxu0 %v876
    %969 = vmatpush1.bf16.msra.mxu0 %v875
    %970 = vmatprep.subr.bf16.mxu0 %v880
    %971 = vmatpush1.bf16.msra.mxu0 %v879
    %972 = vmatprep.subr.bf16.mxu0 %v884
    %973 = vmatpush1.bf16.msra.mxu0 %v883
    %974 = vmatprep.subr.bf16.mxu0 %v888
    %975 = vmatpush1.bf16.msra.mxu0 %v887
    %976 = vmatprep.subr.bf16.mxu0 %v892
    %977 = vmatpush1.bf16.msra.mxu0 %v891
    %978 = vmatprep.subr.bf16.mxu0 %v896
    %979 = vmatpush1.bf16.msra.mxu0 %v895
    %980 = vmatprep.subr.bf16.mxu0 %v900
    %981 = vmatpush1.bf16.msra.mxu0 %v899
    %982 = vmatprep.subr.bf16.mxu0 %v904
    %983 = vmatpush1.bf16.msra.mxu0 %v903
    %984 = vmatprep.subr.bf16.mxu0 %v908
    %985 = vmatpush1.bf16.msra.mxu0 %v907
    %986 = vmatprep.subr.bf16.mxu0 %v912
    %987 = vmatpush1.bf16.msra.mxu0 %v911
    %988 = vmatprep.mubr.bf16.mxu0 %v722
    %989 = vmatmul.mubr.bf16.gmra.mrb[0].mxu0 %v721
    %v990 = vpop.f32.mrb[0].mxu0
    %v991 = vadd.f32 %v950, %v990
    %v992 = vpop.f32.mrb[0].mxu0
    %v993 = vadd.f32 %v952, %v992
    %v994 = vpop.f32.mrb[0].mxu0
    %v995 = vpop.f32.mrb[0].mxu0
    %996 = vdwg.mxu0
    %997 = vmatprep.subr.bf16.mxu0 %v790
    %998 = vmatpush1.bf16.msra.mxu0 %v789
    %999 = vmatprep.subr.bf16.mxu0 %v794
    %1000 = vmatpush1.bf16.msra.mxu0 %v793
    %1001 = vmatprep.subr.bf16.mxu0 %v798
    %1002 = vmatpush1.bf16.msra.mxu0 %v797
    %1003 = vmatprep.subr.bf16.mxu0 %v802
    %1004 = vmatpush1.bf16.msra.mxu0 %v801
    %1005 = vmatprep.subr.bf16.mxu0 %v806
    %1006 = vmatpush1.bf16.msra.mxu0 %v805
    %1007 = vmatprep.subr.bf16.mxu0 %v810
    %1008 = vmatpush1.bf16.msra.mxu0 %v809
    %1009 = vmatprep.subr.bf16.mxu0 %v814
    %1010 = vmatpush1.bf16.msra.mxu0 %v813
    %1011 = vmatprep.subr.bf16.mxu0 %v818
    %1012 = vmatpush1.bf16.msra.mxu0 %v817
    %1013 = vmatprep.subr.bf16.mxu0 %v822
    %1014 = vmatpush1.bf16.msra.mxu0 %v821
    %1015 = vmatprep.subr.bf16.mxu0 %v826
    %1016 = vmatpush1.bf16.msra.mxu0 %v825
    %1017 = vmatprep.subr.bf16.mxu0 %v830
    %1018 = vmatpush1.bf16.msra.mxu0 %v829
    %1019 = vmatprep.subr.bf16.mxu0 %v834
    %1020 = vmatpush1.bf16.msra.mxu0 %v833
    %1021 = vmatprep.subr.bf16.mxu0 %v838
    %1022 = vmatpush1.bf16.msra.mxu0 %v837
    %1023 = vmatprep.subr.bf16.mxu0 %v842
    %1024 = vmatpush1.bf16.msra.mxu0 %v841
    %1025 = vmatprep.subr.bf16.mxu0 %v846
    %1026 = vmatpush1.bf16.msra.mxu0 %v845
    %1027 = vmatprep.subr.bf16.mxu0 %v850
    %1028 = vmatpush1.bf16.msra.mxu0 %v849
    %1029 = vmatprep.mubr.bf16.mxu0 %v720
    %1030 = vmatmul.mubr.bf16.gmra.mrb[0].mxu0 %v719
    %v1031 = vpop.f32.mrb[0].mxu0
    %v1032 = vadd.f32 0.0, %v1031
    %v1033 = vpop.f32.mrb[0].mxu0
    %v1034 = vadd.f32 0.0, %v1033
    %v1035 = vpop.f32.mrb[0].mxu0
    %v1036 = vpop.f32.mrb[0].mxu0
    %1037 = vdwg.mxu0
    %1038 = vmatprep.subr.bf16.mxu0 %v854
    %1039 = vmatpush1.bf16.msra.mxu0 %v853
    %1040 = vmatprep.subr.bf16.mxu0 %v858
    %1041 = vmatpush1.bf16.msra.mxu0 %v857
    %1042 = vmatprep.subr.bf16.mxu0 %v862
    %1043 = vmatpush1.bf16.msra.mxu0 %v861
    %1044 = vmatprep.subr.bf16.mxu0 %v866
    %1045 = vmatpush1.bf16.msra.mxu0 %v865
    %1046 = vmatprep.subr.bf16.mxu0 %v870
    %1047 = vmatpush1.bf16.msra.mxu0 %v869
    %1048 = vmatprep.subr.bf16.mxu0 %v874
    %1049 = vmatpush1.bf16.msra.mxu0 %v873
    %1050 = vmatprep.subr.bf16.mxu0 %v878
    %1051 = vmatpush1.bf16.msra.mxu0 %v877
    %1052 = vmatprep.subr.bf16.mxu0 %v882
    %1053 = vmatpush1.bf16.msra.mxu0 %v881
    %1054 = vmatprep.subr.bf16.mxu0 %v886
    %1055 = vmatpush1.bf16.msra.mxu0 %v885
    %1056 = vmatprep.subr.bf16.mxu0 %v890
    %1057 = vmatpush1.bf16.msra.mxu0 %v889
    %1058 = vmatprep.subr.bf16.mxu0 %v894
    %1059 = vmatpush1.bf16.msra.mxu0 %v893
    %1060 = vmatprep.subr.bf16.mxu0 %v898
    %1061 = vmatpush1.bf16.msra.mxu0 %v897
    %1062 = vmatprep.subr.bf16.mxu0 %v902
    %1063 = vmatpush1.bf16.msra.mxu0 %v901
    %1064 = vmatprep.subr.bf16.mxu0 %v906
    %1065 = vmatpush1.bf16.msra.mxu0 %v905
    %1066 = vmatprep.subr.bf16.mxu0 %v910
    %1067 = vmatpush1.bf16.msra.mxu0 %v909
    %1068 = vmatprep.subr.bf16.mxu0 %v914
    %1069 = vmatpush1.bf16.msra.mxu0 %v913
    %1070 = vmatprep.mubr.bf16.mxu0 %v722
    %1071 = vmatmul.mubr.bf16.gmra.mrb[0].mxu0 %v721
    %v1072 = vpop.f32.mrb[0].mxu0
    %v1073 = vadd.f32 %v1032, %v1072
    %v1074 = vpop.f32.mrb[0].mxu0
    %v1075 = vadd.f32 %v1034, %v1074
    %v1076 = vpop.f32.mrb[0].mxu0
    %v1077 = vpop.f32.mrb[0].mxu0
    %1078 = vdwg.mxu0
    %v1079 = vld [vmem:[%s5] sm:$0xf]
    %v1081 = vlaneseq
    %v1082 = vshrl.u32 %v1081, 7
    %v1083 = vsub.s32 0, %v1082
    %v1084 = vrot.slane %v1079, %v1083
    %v1085 = vlaneseq
    %v1086 = vshrl.u32 %v1085, 7
    %v1087 = vsub.s32 1, %v1086
    %v1088 = vrot.slane %v1079, %v1087
    %v1089 = vlaneseq
    %v1090 = vshrl.u32 %v1089, 7
    %v1091 = vsub.s32 2, %v1090
    %v1092 = vrot.slane %v1079, %v1091
    %v1093 = vlaneseq
    %v1094 = vshrl.u32 %v1093, 7
    %v1095 = vsub.s32 3, %v1094
    %v1096 = vrot.slane %v1079, %v1095
    %v1101 = vmul.f32 %v991, %v1084
    %v1102 = vmul.f32 %v993, %v1088
    %v1103 = vmul.f32 %v1073, %v1092
    %v1104 = vmul.f32 %v1075, %v1096
    %v1105 = vld [vmem:[%s6] sm:$0xf]
    %v1107 = vlaneseq
    %v1108 = vshrl.u32 %v1107, 7
    %v1109 = vsub.s32 0, %v1108
    %v1110 = vrot.slane %v1105, %v1109
    %v1111 = vlaneseq
    %v1112 = vshrl.u32 %v1111, 7
    %v1113 = vsub.s32 1, %v1112
    %v1114 = vrot.slane %v1105, %v1113
    %v1115 = vlaneseq
    %v1116 = vshrl.u32 %v1115, 7
    %v1117 = vsub.s32 2, %v1116
    %v1118 = vrot.slane %v1105, %v1117
    %v1119 = vlaneseq
    %v1120 = vshrl.u32 %v1119, 7
    %v1121 = vsub.s32 3, %v1120
    %v1122 = vrot.slane %v1105, %v1121
    %v1127 = vadd.f32 %v1101, %v1110
    %v1128 = vadd.f32 %v1102, %v1114
    %v1129 = vadd.f32 %v1103, %v1118
    %v1130 = vadd.f32 %v1104, %v1122
    %v1131 = vmax.f32 %v1127, 0.0
    %v1132 = vmax.f32 %v1128, 0.0
    %v1133 = vmax.f32 %v1129, 0.0
    %v1134 = vmax.f32 %v1130, 0.0
    %v1135 = vpack.c.bf16 %v1131, %v1131
    %v1136 = vpack.c.bf16 %v1132, %v1132
    %v1137 = vpack.c.bf16 %v1133, %v1133
    %v1138 = vpack.c.bf16 %v1134, %v1134
    %v1139 = vld [vmem:[#allocation7] sm:$0xff]
    %v1140 = vld [vmem:[#allocation7 + $0x8] sm:$0xff]
    %v1141 = vld [vmem:[#allocation7 + $0x10] sm:$0xff]
    %v1142 = vld [vmem:[#allocation7 + $0x18] sm:$0xff]
    %v1143 = vld [vmem:[#allocation7 + $0x20] sm:$0xff]
    %v1144 = vld [vmem:[#allocation7 + $0x28] sm:$0xff]
    %v1145 = vld [vmem:[#allocation7 + $0x30] sm:$0xff]
    %v1146 = vld [vmem:[#allocation7 + $0x38] sm:$0xff]
    %v1147 = vld [vmem:[#allocation7 + $0x40] sm:$0xff]
    %v1148 = vld [vmem:[#allocation7 + $0x48] sm:$0xff]
    %v1149 = vld [vmem:[#allocation7 + $0x50] sm:$0xff]
    %v1150 = vld [vmem:[#allocation7 + $0x58] sm:$0xff]
    %v1151 = vld [vmem:[#allocation7 + $0x60] sm:$0xff]
    %v1152 = vld [vmem:[#allocation7 + $0x68] sm:$0xff]
    %v1153 = vld [vmem:[#allocation7 + $0x70] sm:$0xff]
    %v1154 = vld [vmem:[#allocation7 + $0x78] sm:$0xff]
    %v1155 = vunpack.c.l.s8.bf16 %v1139
    %v1156 = vunpack.c.h.s8.bf16 %v1139
    %v1157 = vunpack.c.l.s8.bf16 %v1140
    %v1158 = vunpack.c.h.s8.bf16 %v1140
    %v1159 = vunpack.c.l.s8.bf16 %v1141
    %v1160 = vunpack.c.h.s8.bf16 %v1141
    %v1161 = vunpack.c.l.s8.bf16 %v1142
    %v1162 = vunpack.c.h.s8.bf16 %v1142
    %v1163 = vunpack.c.l.s8.bf16 %v1143
    %v1164 = vunpack.c.h.s8.bf16 %v1143
    %v1165 = vunpack.c.l.s8.bf16 %v1144
    %v1166 = vunpack.c.h.s8.bf16 %v1144
    %v1167 = vunpack.c.l.s8.bf16 %v1145
    %v1168 = vunpack.c.h.s8.bf16 %v1145
    %v1169 = vunpack.c.l.s8.bf16 %v1146
    %v1170 = vunpack.c.h.s8.bf16 %v1146
    %v1171 = vunpack.c.l.s8.bf16 %v1147
    %v1172 = vunpack.c.h.s8.bf16 %v1147
    %v1173 = vunpack.c.l.s8.bf16 %v1148
    %v1174 = vunpack.c.h.s8.bf16 %v1148
    %v1175 = vunpack.c.l.s8.bf16 %v1149
    %v1176 = vunpack.c.h.s8.bf16 %v1149
    %v1177 = vunpack.c.l.s8.bf16 %v1150
    %v1178 = vunpack.c.h.s8.bf16 %v1150
    %v1179 = vunpack.c.l.s8.bf16 %v1151
    %v1180 = vunpack.c.h.s8.bf16 %v1151
    %v1181 = vunpack.c.l.s8.bf16 %v1152
    %v1182 = vunpack.c.h.s8.bf16 %v1152
    %v1183 = vunpack.c.l.s8.bf16 %v1153
    %v1184 = vunpack.c.h.s8.bf16 %v1153
    %v1185 = vunpack.c.l.s8.bf16 %v1154
    %v1186 = vunpack.c.h.s8.bf16 %v1154
    %1187 = vmatprep.subr.bf16.mxu0 0
    %1188 = vmatpush1.bf16.msra.mxu0 %v1155
    %1189 = vmatprep.subr.bf16.mxu0 0
    %1190 = vmatpush1.bf16.msra.mxu0 %v1156
    %1191 = vmatprep.subr.bf16.mxu0 0
    %1192 = vmatpush1.bf16.msra.mxu0 %v1157
    %1193 = vmatprep.subr.bf16.mxu0 0
    %1194 = vmatpush1.bf16.msra.mxu0 %v1158
    %1195 = vmatprep.subr.bf16.mxu0 0
    %1196 = vmatpush1.bf16.msra.mxu0 %v1159
    %1197 = vmatprep.subr.bf16.mxu0 0
    %1198 = vmatpush1.bf16.msra.mxu0 %v1160
    %1199 = vmatprep.subr.bf16.mxu0 0
    %1200 = vmatpush1.bf16.msra.mxu0 %v1161
    %1201 = vmatprep.subr.bf16.mxu0 0
    %1202 = vmatpush1.bf16.msra.mxu0 %v1162
    %1203 = vmatprep.subr.bf16.mxu0 0
    %1204 = vmatpush1.bf16.msra.mxu0 %v1163
    %1205 = vmatprep.subr.bf16.mxu0 0
    %1206 = vmatpush1.bf16.msra.mxu0 %v1164
    %1207 = vmatprep.subr.bf16.mxu0 0
    %1208 = vmatpush1.bf16.msra.mxu0 %v1165
    %1209 = vmatprep.subr.bf16.mxu0 0
    %1210 = vmatpush1.bf16.msra.mxu0 %v1166
    %1211 = vmatprep.subr.bf16.mxu0 0
    %1212 = vmatpush1.bf16.msra.mxu0 %v1167
    %1213 = vmatprep.subr.bf16.mxu0 0
    %1214 = vmatpush1.bf16.msra.mxu0 %v1168
    %1215 = vmatprep.subr.bf16.mxu0 0
    %1216 = vmatpush1.bf16.msra.mxu0 %v1169
    %1217 = vmatprep.subr.bf16.mxu0 0
    %1218 = vmatpush1.bf16.msra.mxu0 %v1170
    %1219 = vmatprep.mubr.bf16.mxu0 %v1136
    %1220 = vmatmul.mubr.bf16.gmra.mrb[0].mxu0 %v1135
    %v1221 = vpop.f32.mrb[0].mxu0
    %v1222 = vadd.f32 0.0, %v1221
    %v1223 = vpop.f32.mrb[0].mxu0
    %v1224 = vpop.f32.mrb[0].mxu0
    %v1225 = vpop.f32.mrb[0].mxu0
    %1226 = vdwg.mxu0
    %1227 = vmatprep.subr.bf16.mxu0 0
    %1228 = vmatpush1.bf16.msra.mxu0 %v1171
    %1229 = vmatprep.subr.bf16.mxu0 0
    %1230 = vmatpush1.bf16.msra.mxu0 %v1172
    %1231 = vmatprep.subr.bf16.mxu0 0
    %1232 = vmatpush1.bf16.msra.mxu0 %v1173
    %1233 = vmatprep.subr.bf16.mxu0 0
    %1234 = vmatpush1.bf16.msra.mxu0 %v1174
    %1235 = vmatprep.subr.bf16.mxu0 0
    %1236 = vmatpush1.bf16.msra.mxu0 %v1175
    %1237 = vmatprep.subr.bf16.mxu0 0
    %1238 = vmatpush1.bf16.msra.mxu0 %v1176
    %1239 = vmatprep.subr.bf16.mxu0 0
    %1240 = vmatpush1.bf16.msra.mxu0 %v1177
    %1241 = vmatprep.subr.bf16.mxu0 0
    %1242 = vmatpush1.bf16.msra.mxu0 %v1178
    %1243 = vmatprep.subr.bf16.mxu0 0
    %1244 = vmatpush1.bf16.msra.mxu0 %v1179
    %1245 = vmatprep.subr.bf16.mxu0 0
    %1246 = vmatpush1.bf16.msra.mxu0 %v1180
    %1247 = vmatprep.subr.bf16.mxu0 0
    %1248 = vmatpush1.bf16.msra.mxu0 %v1181
    %1249 = vmatprep.subr.bf16.mxu0 0
    %1250 = vmatpush1.bf16.msra.mxu0 %v1182
    %1251 = vmatprep.subr.bf16.mxu0 0
    %1252 = vmatpush1.bf16.msra.mxu0 %v1183
    %1253 = vmatprep.subr.bf16.mxu0 0
    %1254 = vmatpush1.bf16.msra.mxu0 %v1184
    %1255 = vmatprep.subr.bf16.mxu0 0
    %1256 = vmatpush1.bf16.msra.mxu0 %v1185
    %1257 = vmatprep.subr.bf16.mxu0 0
    %1258 = vmatpush1.bf16.msra.mxu0 %v1186
    %1259 = vmatprep.mubr.bf16.mxu0 %v1138
    %1260 = vmatmul.mubr.bf16.gmra.mrb[0].mxu0 %v1137
    %v1261 = vpop.f32.mrb[0].mxu0
    %v1262 = vadd.f32 %v1222, %v1261
    %v1263 = vpop.f32.mrb[0].mxu0
    %v1264 = vpop.f32.mrb[0].mxu0
    %v1265 = vpop.f32.mrb[0].mxu0
    %1266 = vdwg.mxu0
    %v1267 = vld [vmem:[%s8] sm:$0x1]
    %v1269 = vlaneseq
    %v1270 = vshrl.u32 %v1269, 7
    %v1271 = vsub.s32 0, %v1270
    %v1272 = vrot.slane %v1267, %v1271
    %v1274 = vmul.f32 %v1262, %v1272
    %v1275 = vld [vmem:[%s9] sm:$0x1]
    %v1277 = vlaneseq
    %v1278 = vshrl.u32 %v1277, 7
    %v1279 = vsub.s32 0, %v1278
    %v1280 = vrot.slane %v1275, %v1279
    %v1282 = vadd.f32 %v1274, %v1280
    %p1283 = scmp.eq.s32.totalorder 0, 1
    %v1284 = vmul.f32 %v1282, %v1282
    %vm1285 = vcmask 1041408
    %v1286 = vsel %vm1285, %v1284, 0.0
    %1287 = vadd.xlane.f32.xlu0 %v1286
    %v1288 = vpop.xlane.xlu0 %1287
    %v1289 = vmax.f32 %v1288, 1e-24
    %v1290 = vrsqrt.pop %v1289
    %s1291 = scalar_select %p1283, 1, 0
    %v1292 = vstv %s1291
    %vm1293 = vcmp.eq.s32.totalorder %v1292, 1
    %v1294 = vsel %vm1293, %v1290, 1.0
    %v1295 = vmul.f32 %v1282, %v1294
    %1296 = vst [vmem:[#allocation8] sm:$0x3] %v1295
    // Predicated region
    $region54: #{embedder_forward.1} parent=1 // pred_check
      _
    $region55: #{embedder_forward.1} parent=1 // pred_check_branch
      %1298 = sbr.rel (0) target = $region57
    $region56: #{embedder_forward.1} parent=1 // pred_region
      %s1300 = ssub.s32 32, 32
      %1301 = vsyncadd [#allocation4], %s1300
      %s1303 = sshll.u32 [#allocation8], 4
      %s1304 = int_to_ptr.vmem [resolvable:$true] %s1303
      %1306 = dma.vmem_to_hbm [thread:$0]  %s1304, 32, %s10, [#allocation4]
    $region57: #{embedder_forward.1} parent=1 // pred_fallthru
      _
    // Predicated region
    $region58: #{embedder_forward.1} parent=1 // pred_check
      _
    $region59: #{embedder_forward.1} parent=1 // pred_check_branch
      %1308 = sbr.rel (0) target = $region61
    $region60: #{embedder_forward.1} parent=1 // pred_region
      %1309 = dma.done [#allocation4], 32
    $region61: #{embedder_forward.1} parent=1 // pred_fallthru
      _
    %1310 = vsyncpa [#allocation3], 1
    %1311 = vsyncpa [#allocation6], 1
    %1312 = vsyncpa [#allocation4], 1

</llo_original>
